<compile_context>
chip_gen: v6e
topology: v6e:2x2x1
jax: 0.10.0
libtpu: 0.0.40
codegen_flags: <defaults>
</compile_context>

<pallas_src>
import math

import jax
import jax.numpy as jnp
from jax import lax
from jax.experimental import pallas as pl
from jax.experimental.pallas import tpu as pltpu

LIKELIHOOD_BOUND = 1e-9   # CompressAI likelihood lower bound
SCALE_MIN = 0.11          # CompressAI SCALES_MIN


def _sigmoid(x):
    # Explicit logistic (identical trace in kernel and reference); exp -> EUP.
    return 1.0 / (1.0 + jnp.exp(-x))


def _default_tk_cap():
    """Generation-tuned K-tile cap (v5e ~4096, v6e ~8192, v7x ~16384)."""
    try:
        kind = jax.devices()[0].device_kind.lower()
    except Exception:
        return 8192
    if "v5 lite" in kind or "v5e" in kind or "v5litepod" in kind:
        return 4096
    if "v7" in kind:
        return 16384
    return 8192


def _pick_tk(k_feat, cap):
    """Largest multiple of 128 that divides k_feat and is <= cap."""
    cap = min(cap, k_feat)
    t = (cap // 128) * 128
    while t >= 128:
        if k_feat % t == 0:
            return t
        t -= 128
    return k_feat      # no 128-multiple divisor found; single full-K tile


def _pick_row_block(n, cap=256):
    """Largest divisor of n that is <= cap (epilogue row-chunk size)."""
    blk = min(n, cap)
    while n % blk:
        blk -= 1
    return blk


def _make_bpp_kernel(num_pixels, eb_blk):
    inv = 1.0 / (-math.log(2.0) * float(num_pixels))

    def kernel(x_ref, wy_ref, wz_ref, wmu_ref, ws_ref, ebb_ref, ebs_ref,
               out_ref, y_acc):
        k = pl.program_id(0)

        @pl.when(k == 0)
        def _init():
            y_acc[...] = jnp.zeros_like(y_acc)

        # Streamed K-reduction analysis transform: f32 tiles from HBM, cast to
        # bf16 in-register (no wrapper-side astype pass), f32 MXU accumulation.
        y_acc[...] += jnp.dot(x_ref[...].astype(jnp.bfloat16),
                              wy_ref[...].astype(jnp.bfloat16),
                              preferred_element_type=jnp.float32)

        @pl.when(k == pl.num_programs(0) - 1)
        def _epilogue():
            wz = wz_ref[...]          # [Dy, Dz] f32 (tiny; kept f32 for fidelity)
            wmu = wmu_ref[...]        # [Dz, Dy]
            ws = ws_ref[...]          # [Dz, Dy]
            b = ebb_ref[...]          # [1, Dz]
            sinv = ebs_ref[...]       # [1, Dz]

            def block_logsum(y):
                # y: [blk, Dy] f32
                # --- hyper-analysis (h_a stand-in) + rounding quantization ---
                z = jnp.dot(y, wz, preferred_element_type=jnp.float32)
                z_hat = jnp.floor(z + 0.5)
                # --- factorized logistic entropy-bottleneck likelihoods (z) ---
                lik_z = (_sigmoid((z_hat + 0.5 - b) * sinv)
                         - _sigmoid((z_hat - 0.5 - b) * sinv))
                lik_z = jnp.maximum(lik_z, LIKELIHOOD_BOUND)
                # --- hyper-decoder (h_s stand-in): per-element (mu, 1/scale) ---
                mu = jnp.dot(z_hat, wmu, preferred_element_type=jnp.float32)
                s = jnp.dot(z_hat, ws, preferred_element_type=jnp.float32)
                # inv_s = 1 / max(exp(.5*s), SCALE_MIN) without divide / max.
                inv_s = jnp.minimum(jnp.exp(-0.5 * s), 1.0 / SCALE_MIN)
                # --- conditional likelihoods of the quantized residual ---
                r = jnp.floor(y - mu + 0.5)
                lik_y = (_sigmoid((r + 0.5) * inv_s)
                         - _sigmoid((r - 0.5) * inv_s))
                lik_y = jnp.maximum(lik_y, LIKELIHOOD_BOUND)
                s_y = jnp.sum(jnp.sum(jnp.log(lik_y), axis=-1, keepdims=True),
                              axis=0, keepdims=True)
                s_z = jnp.sum(jnp.sum(jnp.log(lik_z), axis=-1, keepdims=True),
                              axis=0, keepdims=True)
                return s_y + s_z                                   # [1, 1]

            n_rows = y_acc.shape[0]
            n_blocks = n_rows // eb_blk
            if n_blocks == 1:
                total = block_logsum(y_acc[...])
            else:
                # Chunk the serial tail over row blocks so it stays in-register
                # at real N instead of 6+ live [N, Dy] f32 temporaries.
                def body(i, tot):
                    r0 = pl.multiple_of(i * eb_blk, eb_blk)
                    return tot + block_logsum(y_acc[pl.ds(r0, eb_blk), :])
                total = lax.fori_loop(0, n_blocks, body,
                                      jnp.zeros((1, 1), jnp.float32))

            # (1,1) VMEM output lowers to a masked partial store on a padded
            # (8,128) tile -- negligible here; an SMEM scalar would avoid it.
            out_ref[...] = total * inv

    return kernel


def bpp_loss_pallas(x, wy, wz, wmu, ws, eb_b, eb_sinv, *, tk=None):
    n, c, h, w = x.shape
    k_feat = c * h * w
    dy = wy.shape[1]
    dz = wz.shape[1]
    num_pixels = n * h * w                      # x_hat keeps the input N, H, W

    if tk is None:
        tk = _pick_tk(k_feat, _default_tk_cap())
    tk = min(tk, k_feat)
    assert k_feat % tk == 0 and (tk % 128 == 0 or tk == k_feat), (k_feat, tk)

    # Glue: contiguous flatten only -- NO dtype casts in the wrapper (a wrapper
    # astype is an extra full HBM read+write pass; the kernel casts each
    # streamed f32 tile to bf16 in-register instead).
    xf = x.reshape(n, k_feat)
    # NOTE: with n < 8 the [n, tk] @ [tk, dy] matmul uses only n MXU rows;
    # acceptable because the kernel is Wy-bandwidth bound, but real workloads
    # should keep n a multiple of 16 (bf16 sublanes) and ideally >= 128.

    eb_blk = _pick_row_block(n)

    # Scoped-VMEM limit from actual tile bytes, clamped to [32 MiB, 48 MiB]:
    # above v5e's 16 MiB scoped default, with headroom under v7x's 64 MiB
    # physical per-TC VMEM.
    tile_bytes = 2 * (n * tk + tk * dy) * 4               # 2x-buffered f32 x / Wy
    resident_bytes = (dy * dz + 2 * dz * dy + 2 * dz) * 4 * 2 + n * dy * 4
    vmem_limit = int(1.5 * (tile_bytes + resident_bytes)) + (4 << 20)
    vmem_limit = min(max(vmem_limit, 32 << 20), 48 << 20)

    cost = pl.CostEstimate(
        flops=2 * n * k_feat * dy + 2 * n * dy * dz + 4 * n * dz * dy,
        transcendentals=5 * n * dy + 4 * n * dz,
        bytes_accessed=4 * (n * k_feat + k_feat * dy + dy * dz
                            + 2 * dz * dy + 2 * dz) + 4,
    )

    out = pl.pallas_call(
        _make_bpp_kernel(num_pixels, eb_blk),
        out_shape=jax.ShapeDtypeStruct((1, 1), jnp.float32),
        grid_spec=pltpu.PrefetchScalarGridSpec(
            num_scalar_prefetch=0,
            grid=(k_feat // tk,),
            in_specs=[
                pl.BlockSpec((n, tk), lambda k: (0, k)),     # x (f32), K-tiled
                pl.BlockSpec((tk, dy), lambda k: (k, 0)),    # Wy (f32), K-tiled
                # Epilogue-only operands (tiny at 128x128; see TODO at top).
                pl.BlockSpec((dy, dz), lambda k: (0, 0)),    # Wz
                pl.BlockSpec((dz, dy), lambda k: (0, 0)),    # Wmu
                pl.BlockSpec((dz, dy), lambda k: (0, 0)),    # Ws
                pl.BlockSpec((1, dz), lambda k: (0, 0)),     # EB bias
                pl.BlockSpec((1, dz), lambda k: (0, 0)),     # EB inv-scale
            ],
            out_specs=pl.BlockSpec((1, 1), lambda k: (0, 0)),
            scratch_shapes=[pltpu.VMEM((n, dy), jnp.float32)],   # y accumulator
        ),
        compiler_params=pltpu.CompilerParams(
            # Single 'arbitrary' K axis; deliberately NOT split across v7x's two
            # TensorCores: the kernel is HBM-BW bound on Wy and HBM is shared.
            dimension_semantics=("arbitrary",),
            vmem_limit_bytes=vmem_limit,
        ),
        cost_estimate=cost,
    )(xf, wy, wz, wmu, ws, eb_b, eb_sinv)
    return out[0, 0]


def bpp_loss_ref(x, wy, wz, wmu, ws, eb_b, eb_sinv, *, tk):
    """Pure-JAX reference of the same (synthetic-compression-model) forward."""
    n, c, h, w = x.shape
    k_feat = c * h * w
    num_pixels = n * h * w
    tk = min(tk, k_feat)
    dy = wy.shape[1]

    xf = x.reshape(n, k_feat)

    # Mirror the kernel's K-tiled bf16-in / f32-accumulate matmul exactly.
    y = jnp.zeros((n, dy), jnp.float32)
    for k0 in range(0, k_feat, tk):
        y = y + jnp.dot(xf[:, k0:k0 + tk].astype(jnp.bfloat16),
                        wy[k0:k0 + tk].astype(jnp.bfloat16),
                        preferred_element_type=jnp.float32)

    z = jnp.dot(y, wz, preferred_element_type=jnp.float32)
    z_hat = jnp.floor(z + 0.5)
    lik_z = (_sigmoid((z_hat + 0.5 - eb_b) * eb_sinv)
             - _sigmoid((z_hat - 0.5 - eb_b) * eb_sinv))
    lik_z = jnp.maximum(lik_z, LIKELIHOOD_BOUND)

    mu = jnp.dot(z_hat, wmu, preferred_element_type=jnp.float32)
    s = jnp.dot(z_hat, ws, preferred_element_type=jnp.float32)
    inv_s = jnp.minimum(jnp.exp(-0.5 * s), 1.0 / SCALE_MIN)
    r = jnp.floor(y - mu + 0.5)
    lik_y = jnp.maximum(_sigmoid((r + 0.5) * inv_s) - _sigmoid((r - 0.5) * inv_s),
                        LIKELIHOOD_BOUND)

    total = jnp.sum(jnp.log(lik_y)) + jnp.sum(jnp.log(lik_z))
    return total / (-math.log(2.0) * num_pixels)


if __name__ == "__main__":
    key = jax.random.PRNGKey(0)
    kx, k1, k2, k3, k4, k5, k6 = jax.random.split(key, 7)

    n, c, h, w = 2, 3, 32, 32               # small stand-in for real image shapes
    dy, dz = 128, 128                       # synthetic latent / hyper-latent dims
    k_feat = c * h * w                      # K = 3072

    x = jax.random.uniform(kx, (n, c, h, w), jnp.float32)
    # Deterministic synthetic compression-model parameters (stand-in for mbt2018).
    wy = jax.random.normal(k1, (k_feat, dy), jnp.float32) / math.sqrt(k_feat)
    wz = jax.random.normal(k2, (dy, dz), jnp.float32) / math.sqrt(dy)
    wmu = jax.random.normal(k3, (dz, dy), jnp.float32) / math.sqrt(dz)
    ws = jax.random.normal(k4, (dz, dy), jnp.float32) / math.sqrt(dz)
    eb_b = jax.random.normal(k5, (1, dz), jnp.float32) * 0.5
    eb_sinv = jnp.exp(jax.random.normal(k6, (1, dz), jnp.float32) * 0.25)

    # Multi-step K stream (grid of 3) exercises init / accumulate / epilogue.
    loss = bpp_loss_pallas(x, wy, wz, wmu, ws, eb_b, eb_sinv, tk=1024)
    jax.block_until_ready(loss)
    ref = bpp_loss_ref(x, wy, wz, wmu, ws, eb_b, eb_sinv, tk=1024)
    assert jnp.allclose(loss, ref, atol=5e-3, rtol=5e-3), (loss, ref)

    # Default generation-tuned tile (K=3072 fits in a single step here).
    loss_d = bpp_loss_pallas(x, wy, wz, wmu, ws, eb_b, eb_sinv)
    jax.block_until_ready(loss_d)
    ref_d = bpp_loss_ref(x, wy, wz, wmu, ws, eb_b, eb_sinv, tk=k_feat)
    assert jnp.allclose(loss_d, ref_d, atol=5e-3, rtol=5e-3), (loss_d, ref_d)

    print("KERNEL_OK")
</pallas_src>

<mosaic_0001>
module attributes {stable_mosaic.version = 11 : i64} {
  func.func @kernel(%arg0: i32, %arg1: memref<2x1024xf32, #tpu.memory_space<vmem>>, %arg2: memref<1024x128xf32, #tpu.memory_space<vmem>>, %arg3: memref<128x128xf32, #tpu.memory_space<vmem>>, %arg4: memref<128x128xf32, #tpu.memory_space<vmem>>, %arg5: memref<128x128xf32, #tpu.memory_space<vmem>>, %arg6: memref<1x128xf32, #tpu.memory_space<vmem>>, %arg7: memref<1x128xf32, #tpu.memory_space<vmem>>, %arg8: memref<1x1xf32, #tpu.memory_space<vmem>>, %arg9: memref<2x128xf32, #tpu.memory_space<vmem>>) attributes {dimension_semantics = [#tpu.dimension_semantics<arbitrary>], iteration_bounds = array<i64: 3>, scalar_prefetch = 0 : i64, scratch_operands = 1 : i64, tpu.core_type = #tpu.core_type<tc>, window_params = [{transform_indices = @transform_0, window_bounds = array<i64: 2, 1024>}, {transform_indices = @transform_1, window_bounds = array<i64: 1024, 128>}, {pipeline_mode = #tpu.pipeline_mode<synchronous>, transform_indices = @transform_2, window_bounds = array<i64: 128, 128>}, {pipeline_mode = #tpu.pipeline_mode<synchronous>, transform_indices = @transform_3, window_bounds = array<i64: 128, 128>}, {pipeline_mode = #tpu.pipeline_mode<synchronous>, transform_indices = @transform_4, window_bounds = array<i64: 128, 128>}, {pipeline_mode = #tpu.pipeline_mode<synchronous>, transform_indices = @transform_5, window_bounds = array<i64: 1, 128>}, {pipeline_mode = #tpu.pipeline_mode<synchronous>, transform_indices = @transform_6, window_bounds = array<i64: 1, 128>}, {pipeline_mode = #tpu.pipeline_mode<synchronous>, transform_indices = @transform_7, window_bounds = array<i64: 1, 1>}]} {
    %c0_i32 = arith.constant 0 : i32
    %0 = arith.cmpi eq, %arg0, %c0_i32 : i32
    %1 = arith.extui %0 : i1 to i32
    %c0_i32_0 = arith.constant 0 : i32
    %2 = arith.cmpi ne, %1, %c0_i32_0 : i32
    scf.if %2 {
      %cst_9 = arith.constant 0.000000e+00 : f32
      %14 = vector.broadcast %cst_9 : f32 to vector<2x128xf32>
      %c0_10 = arith.constant 0 : index
      %c0_11 = arith.constant 0 : index
      %15 = vector.load %arg9[%c0_10, %c0_11] : memref<2x128xf32, #tpu.memory_space<vmem>>, vector<2x128xf32>
      tpu.vector_store %arg9[%c0_10, %c0_11], %14 {strides = array<i32>} : memref<2x128xf32, #tpu.memory_space<vmem>>, vector<2x128xf32>,
    } else {
    }
    %c0 = arith.constant 0 : index
    %c0_1 = arith.constant 0 : index
    %3 = vector.load %arg9[%c0, %c0_1] : memref<2x128xf32, #tpu.memory_space<vmem>>, vector<2x128xf32>
    %c0_2 = arith.constant 0 : index
    %c0_3 = arith.constant 0 : index
    %4 = vector.load %arg1[%c0_2, %c0_3] : memref<2x1024xf32, #tpu.memory_space<vmem>>, vector<2x1024xf32>
    %5 = arith.truncf %4 : vector<2x1024xf32> to vector<2x1024xbf16>
    %c0_4 = arith.constant 0 : index
    %c0_5 = arith.constant 0 : index
    %6 = vector.load %arg2[%c0_4, %c0_5] : memref<1024x128xf32, #tpu.memory_space<vmem>>, vector<1024x128xf32>
    %7 = arith.truncf %6 : vector<1024x128xf32> to vector<1024x128xbf16>
    %cst = arith.constant dense<0.000000e+00> : vector<2x128xf32>
    %8 = tpu.matmul %5, %7, %cst {dimension_numbers = #tpu.dot_dimension_numbers<[1], [0], [0], [1], [0, 0, 1, 1], [], []>} : vector<2x1024xbf16>, vector<1024x128xbf16>, vector<2x128xf32> -> vector<2x128xf32>
    %9 = arith.addf %3, %8 : vector<2x128xf32>
    %c0_6 = arith.constant 0 : index
    %c0_7 = arith.constant 0 : index
    %10 = vector.load %arg9[%c0_6, %c0_7] : memref<2x128xf32, #tpu.memory_space<vmem>>, vector<2x128xf32>
    tpu.vector_store %arg9[%c0_6, %c0_7], %9 {strides = array<i32>} : memref<2x128xf32, #tpu.memory_space<vmem>>, vector<2x128xf32>,
    %c2_i32 = arith.constant 2 : i32
    %11 = arith.cmpi eq, %arg0, %c2_i32 : i32
    %12 = arith.extui %11 : i1 to i32
    %c0_i32_8 = arith.constant 0 : i32
    %13 = arith.cmpi ne, %12, %c0_i32_8 : i32
    scf.if %13 {
      %c0_9 = arith.constant 0 : index
      %c0_10 = arith.constant 0 : index
      %14 = vector.load %arg3[%c0_9, %c0_10] : memref<128x128xf32, #tpu.memory_space<vmem>>, vector<128x128xf32>
      %c0_11 = arith.constant 0 : index
      %c0_12 = arith.constant 0 : index
      %15 = vector.load %arg4[%c0_11, %c0_12] : memref<128x128xf32, #tpu.memory_space<vmem>>, vector<128x128xf32>
      %c0_13 = arith.constant 0 : index
      %c0_14 = arith.constant 0 : index
      %16 = vector.load %arg5[%c0_13, %c0_14] : memref<128x128xf32, #tpu.memory_space<vmem>>, vector<128x128xf32>
      %c0_15 = arith.constant 0 : index
      %c0_16 = arith.constant 0 : index
      %17 = vector.load %arg6[%c0_15, %c0_16] : memref<1x128xf32, #tpu.memory_space<vmem>>, vector<1x128xf32>
      %c0_17 = arith.constant 0 : index
      %c0_18 = arith.constant 0 : index
      %18 = vector.load %arg7[%c0_17, %c0_18] : memref<1x128xf32, #tpu.memory_space<vmem>>, vector<1x128xf32>
      %c0_19 = arith.constant 0 : index
      %c0_20 = arith.constant 0 : index
      %19 = vector.load %arg9[%c0_19, %c0_20] : memref<2x128xf32, #tpu.memory_space<vmem>>, vector<2x128xf32>
      %cst_21 = arith.constant dense<0.000000e+00> : vector<2x128xf32>
      %20 = tpu.matmul %19, %14, %cst_21 {dimension_numbers = #tpu.dot_dimension_numbers<[1], [0], [0], [1], [0, 0, 1, 1], [], []>} : vector<2x128xf32>, vector<128x128xf32>, vector<2x128xf32> -> vector<2x128xf32>
      %cst_22 = arith.constant 5.000000e-01 : f32
      %21 = vector.broadcast %cst_22 : f32 to vector<2x128xf32>
      %22 = arith.addf %20, %21 : vector<2x128xf32>
      %23 = math.floor %22 : vector<2x128xf32>
      %cst_23 = arith.constant 5.000000e-01 : f32
      %24 = vector.broadcast %cst_23 : f32 to vector<2x128xf32>
      %25 = arith.addf %23, %24 : vector<2x128xf32>
      %26 = vector.broadcast %17 : vector<1x128xf32> to vector<2x128xf32>
      %27 = arith.subf %25, %26 : vector<2x128xf32>
      %28 = vector.broadcast %18 : vector<1x128xf32> to vector<2x128xf32>
      %29 = arith.mulf %27, %28 : vector<2x128xf32>
      %cst_24 = arith.constant 0.000000e+00 : f32
      %30 = vector.broadcast %cst_24 : f32 to vector<2x128xf32>
      %31 = arith.subf %30, %29 : vector<2x128xf32>
      %32 = math.exp %31 : vector<2x128xf32>
      %cst_25 = arith.constant 1.000000e+00 : f32
      %33 = vector.broadcast %cst_25 : f32 to vector<2x128xf32>
      %34 = arith.addf %33, %32 : vector<2x128xf32>
      %cst_26 = arith.constant 1.000000e+00 : f32
      %35 = vector.broadcast %cst_26 : f32 to vector<2x128xf32>
      %36 = arith.divf %35, %34 : vector<2x128xf32>
      %cst_27 = arith.constant 5.000000e-01 : f32
      %37 = vector.broadcast %cst_27 : f32 to vector<2x128xf32>
      %38 = arith.subf %23, %37 : vector<2x128xf32>
      %39 = vector.broadcast %17 : vector<1x128xf32> to vector<2x128xf32>
      %40 = arith.subf %38, %39 : vector<2x128xf32>
      %41 = vector.broadcast %18 : vector<1x128xf32> to vector<2x128xf32>
      %42 = arith.mulf %40, %41 : vector<2x128xf32>
      %cst_28 = arith.constant 0.000000e+00 : f32
      %43 = vector.broadcast %cst_28 : f32 to vector<2x128xf32>
      %44 = arith.subf %43, %42 : vector<2x128xf32>
      %45 = math.exp %44 : vector<2x128xf32>
      %cst_29 = arith.constant 1.000000e+00 : f32
      %46 = vector.broadcast %cst_29 : f32 to vector<2x128xf32>
      %47 = arith.addf %46, %45 : vector<2x128xf32>
      %cst_30 = arith.constant 1.000000e+00 : f32
      %48 = vector.broadcast %cst_30 : f32 to vector<2x128xf32>
      %49 = arith.divf %48, %47 : vector<2x128xf32>
      %50 = arith.subf %36, %49 : vector<2x128xf32>
      %cst_31 = arith.constant 9.99999971E-10 : f32
      %51 = vector.broadcast %cst_31 : f32 to vector<2x128xf32>
      %52 = arith.maximumf %50, %51 : vector<2x128xf32>
      %cst_32 = arith.constant dense<0.000000e+00> : vector<2x128xf32>
      %53 = tpu.matmul %23, %15, %cst_32 {dimension_numbers = #tpu.dot_dimension_numbers<[1], [0], [0], [1], [0, 0, 1, 1], [], []>} : vector<2x128xf32>, vector<128x128xf32>, vector<2x128xf32> -> vector<2x128xf32>
      %cst_33 = arith.constant dense<0.000000e+00> : vector<2x128xf32>
      %54 = tpu.matmul %23, %16, %cst_33 {dimension_numbers = #tpu.dot_dimension_numbers<[1], [0], [0], [1], [0, 0, 1, 1], [], []>} : vector<2x128xf32>, vector<128x128xf32>, vector<2x128xf32> -> vector<2x128xf32>
      %cst_34 = arith.constant -5.000000e-01 : f32
      %55 = vector.broadcast %cst_34 : f32 to vector<2x128xf32>
      %56 = arith.mulf %55, %54 : vector<2x128xf32>
      %57 = math.exp %56 : vector<2x128xf32>
      %cst_35 = arith.constant 9.090909 : f32
      %58 = vector.broadcast %cst_35 : f32 to vector<2x128xf32>
      %59 = arith.minimumf %57, %58 : vector<2x128xf32>
      %60 = arith.subf %19, %53 : vector<2x128xf32>
      %cst_36 = arith.constant 5.000000e-01 : f32
      %61 = vector.broadcast %cst_36 : f32 to vector<2x128xf32>
      %62 = arith.addf %60, %61 : vector<2x128xf32>
      %63 = math.floor %62 : vector<2x128xf32>
      %cst_37 = arith.constant 5.000000e-01 : f32
      %64 = vector.broadcast %cst_37 : f32 to vector<2x128xf32>
      %65 = arith.addf %63, %64 : vector<2x128xf32>
      %66 = arith.mulf %65, %59 : vector<2x128xf32>
      %cst_38 = arith.constant 0.000000e+00 : f32
      %67 = vector.broadcast %cst_38 : f32 to vector<2x128xf32>
      %68 = arith.subf %67, %66 : vector<2x128xf32>
      %69 = math.exp %68 : vector<2x128xf32>
      %cst_39 = arith.constant 1.000000e+00 : f32
      %70 = vector.broadcast %cst_39 : f32 to vector<2x128xf32>
      %71 = arith.addf %70, %69 : vector<2x128xf32>
      %cst_40 = arith.constant 1.000000e+00 : f32
      %72 = vector.broadcast %cst_40 : f32 to vector<2x128xf32>
      %73 = arith.divf %72, %71 : vector<2x128xf32>
      %cst_41 = arith.constant 5.000000e-01 : f32
      %74 = vector.broadcast %cst_41 : f32 to vector<2x128xf32>
      %75 = arith.subf %63, %74 : vector<2x128xf32>
      %76 = arith.mulf %75, %59 : vector<2x128xf32>
      %cst_42 = arith.constant 0.000000e+00 : f32
      %77 = vector.broadcast %cst_42 : f32 to vector<2x128xf32>
      %78 = arith.subf %77, %76 : vector<2x128xf32>
      %79 = math.exp %78 : vector<2x128xf32>
      %cst_43 = arith.constant 1.000000e+00 : f32
      %80 = vector.broadcast %cst_43 : f32 to vector<2x128xf32>
      %81 = arith.addf %80, %79 : vector<2x128xf32>
      %cst_44 = arith.constant 1.000000e+00 : f32
      %82 = vector.broadcast %cst_44 : f32 to vector<2x128xf32>
      %83 = arith.divf %82, %81 : vector<2x128xf32>
      %84 = arith.subf %73, %83 : vector<2x128xf32>
      %cst_45 = arith.constant 9.99999971E-10 : f32
      %85 = vector.broadcast %cst_45 : f32 to vector<2x128xf32>
      %86 = arith.maximumf %84, %85 : vector<2x128xf32>
      %87 = math.log %86 : vector<2x128xf32>
      %cst_46 = arith.constant dense<0.000000e+00> : vector<2xf32>
      %88 = vector.multi_reduction <add>, %87, %cst_46 [1] : vector<2x128xf32> to vector<2xf32>
      %89 = vector.shape_cast %88 : vector<2xf32> to vector<2x1xf32>
      %cst_47 = arith.constant dense<0.000000e+00> : vector<1xf32>
      %90 = vector.multi_reduction <add>, %89, %cst_47 [0] : vector<2x1xf32> to vector<1xf32>
      %91 = vector.shape_cast %90 : vector<1xf32> to vector<1x1xf32>
      %92 = math.log %52 : vector<2x128xf32>
      %cst_48 = arith.constant dense<0.000000e+00> : vector<2xf32>
      %93 = vector.multi_reduction <add>, %92, %cst_48 [1] : vector<2x128xf32> to vector<2xf32>
      %94 = vector.shape_cast %93 : vector<2xf32> to vector<2x1xf32>
      %cst_49 = arith.constant dense<0.000000e+00> : vector<1xf32>
      %95 = vector.multi_reduction <add>, %94, %cst_49 [0] : vector<2x1xf32> to vector<1xf32>
      %96 = vector.shape_cast %95 : vector<1xf32> to vector<1x1xf32>
      %97 = arith.addf %91, %96 : vector<1x1xf32>
      %cst_50 = arith.constant -7.04440929E-4 : f32
      %98 = vector.broadcast %cst_50 : f32 to vector<1x1xf32>
      %99 = arith.mulf %97, %98 : vector<1x1xf32>
      %c0_51 = arith.constant 0 : index
      %c0_52 = arith.constant 0 : index
      %100 = vector.load %arg8[%c0_51, %c0_52] : memref<1x1xf32, #tpu.memory_space<vmem>>, vector<1x1xf32>
      tpu.vector_store %arg8[%c0_51, %c0_52], %99 {strides = array<i32>} : memref<1x1xf32, #tpu.memory_space<vmem>>, vector<1x1xf32>,
    } else {
    }
    return
  }
  func.func @transform_0(%arg0: i32) -> (i32, i32) {
    %c0_i32 = arith.constant 0 : i32
    %c0_i32_0 = arith.constant 0 : i32
    return %c0_i32, %arg0 : i32, i32
  }
  func.func @transform_1(%arg0: i32) -> (i32, i32) {
    %c0_i32 = arith.constant 0 : i32
    %c0_i32_0 = arith.constant 0 : i32
    return %arg0, %c0_i32 : i32, i32
  }
  func.func @transform_2(%arg0: i32) -> (i32, i32) {
    %c0_i32 = arith.constant 0 : i32
    %c0_i32_0 = arith.constant 0 : i32
    %c0_i32_1 = arith.constant 0 : i32
    return %c0_i32, %c0_i32_0 : i32, i32
  }
  func.func @transform_3(%arg0: i32) -> (i32, i32) {
    %c0_i32 = arith.constant 0 : i32
    %c0_i32_0 = arith.constant 0 : i32
    %c0_i32_1 = arith.constant 0 : i32
    return %c0_i32, %c0_i32_0 : i32, i32
  }
  func.func @transform_4(%arg0: i32) -> (i32, i32) {
    %c0_i32 = arith.constant 0 : i32
    %c0_i32_0 = arith.constant 0 : i32
    %c0_i32_1 = arith.constant 0 : i32
    return %c0_i32, %c0_i32_0 : i32, i32
  }
  func.func @transform_5(%arg0: i32) -> (i32, i32) {
    %c0_i32 = arith.constant 0 : i32
    %c0_i32_0 = arith.constant 0 : i32
    %c0_i32_1 = arith.constant 0 : i32
    return %c0_i32, %c0_i32_0 : i32, i32
  }
  func.func @transform_6(%arg0: i32) -> (i32, i32) {
    %c0_i32 = arith.constant 0 : i32
    %c0_i32_0 = arith.constant 0 : i32
    %c0_i32_1 = arith.constant 0 : i32
    return %c0_i32, %c0_i32_0 : i32, i32
  }
  func.func @transform_7(%arg0: i32) -> (i32, i32) {
    %c0_i32 = arith.constant 0 : i32
    %c0_i32_0 = arith.constant 0 : i32
    %c0_i32_1 = arith.constant 0 : i32
    return %c0_i32, %c0_i32_0 : i32, i32
  }
}

</mosaic_0001>

<llo_original>
// kernel: tpu_custom_call.1
$region0: #{tpu_custom_call.1}
  #allocation0 [shape = 'u32[]', space=smem, size = 0x4, offset = 0x4, fixed_abs, tag = 'smem constant byte address 0x4 - core index']
  #allocation1 [shape = 'u32[144,128]{1,0:T(1,128)}', space=vmem, size = 0x12000, scoped, tag = 'internal scratch']
  #allocation2 [shape = 'f32[2,128]{1,0:T(2,128)}', space=vmem, size = 0x400, scoped, tag = 'scratch operand']
  %s0 = inlined_call_operand.hbm [shape: f32[2,3072], index: 0, kind: input, shape index: {}]
  %s1 = inlined_call_operand.hbm [shape: f32[3072,128], index: 1, kind: input, shape index: {}]
  %s2 = inlined_call_operand.hbm [shape: f32[128,128], index: 2, kind: input, shape index: {}]
  %s3 = inlined_call_operand.hbm [shape: f32[128,128], index: 3, kind: input, shape index: {}]
  %s4 = inlined_call_operand.hbm [shape: f32[128,128], index: 4, kind: input, shape index: {}]
  %s5 = inlined_call_operand.hbm [shape: f32[1,128], index: 5, kind: input, shape index: {}]
  %s6 = inlined_call_operand.hbm [shape: f32[1,128], index: 6, kind: input, shape index: {}]
  %s7 = inlined_call_operand.hbm [shape: f32[1,1], index: 7, kind: output, shape index: {}]
  %s8 = sld [smem:[#allocation0]]
  $region97: #{tpu_custom_call.1} parent=0
    _
  %s10 = ssub.s32 1, %s8
  %s11 = scalar_select 0, %s10, %s8
  $region1: #{tpu_custom_call.1} parent=0
    #allocation3 [shape = 'u8[16384]{0}', space=vmem, size = 0x4000, scoped, tag = 'input window, operand 0']
    #allocation4 [shape = 's32[2]{0}', space=sflag, size = 0x8, scoped, tag = 'scoped memory for tpu_custom_call.1']
    #allocation5 [shape = 's32[2]{0}', space=sflag, size = 0x8, scoped, tag = 'scoped memory for tpu_custom_call.1']
    #allocation6 [shape = 'u8[1048576]{0}', space=vmem, size = 0x100000, scoped, tag = 'input window, operand 1']
    #allocation7 [shape = 's32[2]{0}', space=sflag, size = 0x8, scoped, tag = 'scoped memory for tpu_custom_call.1']
    #allocation8 [shape = 'u8[65536]{0}', space=vmem, size = 0x10000, scoped, tag = 'input window, operand 2, single buffered']
    #allocation9 [shape = 'u8[65536]{0}', space=vmem, size = 0x10000, scoped, tag = 'input window, operand 3, single buffered']
    #allocation10 [shape = 's32[1]{0}', space=sflag, size = 0x4, scoped, tag = 'scoped memory for tpu_custom_call.1']
    #allocation11 [shape = 'u8[65536]{0}', space=vmem, size = 0x10000, scoped, tag = 'input window, operand 4, single buffered']
    #allocation12 [shape = 'u8[512]{0}', space=vmem, size = 0x400, scoped, tag = 'input window, operand 5, single buffered']
    #allocation13 [shape = 's32[1]{0}', space=sflag, size = 0x4, scoped, tag = 'scoped memory for tpu_custom_call.1']
    #allocation14 [shape = 'u8[512]{0}', space=vmem, size = 0x400, scoped, tag = 'input window, operand 6, single buffered']
    #allocation15 [shape = 'u8[512]{0}', space=vmem, size = 0x400, scoped, tag = 'output window, operand 0, single buffered']
    %12 = vsyncpa [#allocation4], 0
    %s13 = scalar_lea.sflag [#allocation4], 1
    %14 = vsyncpa %s13, 0
    %15 = vsyncpa [#allocation7], 0
    %s16 = scalar_lea.sflag [#allocation7], 1
    %17 = vsyncpa %s16, 0
    %18 = vsyncpa [#allocation10], 0
    %19 = vsyncpa [#allocation13], 0
    %20 = vsyncpa [#allocation5], 0
    loop: start=0, step=1, limit=5
    $region2: #{tpu_custom_call.1} parent=1 // loop_pre_header
      _
    $region3: #{tpu_custom_call.1} parent=1 // loop_header
      %s22 = sphi 0, %s26
      %p23 = scmp.ge.s32.totalorder %s22, 5
      %s32 = sphi 0, %s34
      %s35 = sphi 0, %s32
      %s36 = sphi 0, %s35
      %s52 = sphi 0, %s36
      %s58 = sphi 0, %s60
      %s61 = sphi 0, %s58
      %s62 = sphi 0, %s61
      %s78 = sphi 0, %s62
      %s82 = sphi 0, %s82
      %s84 = sphi 0, %s82
      %s85 = sphi 0, %s84
      %s99 = sphi 0, %s85
      %s103 = sphi 0, %s103
      %s105 = sphi 0, %s103
      %s106 = sphi 0, %s105
      %s120 = sphi 0, %s106
      %s124 = sphi 0, %s124
      %s126 = sphi 0, %s124
      %s127 = sphi 0, %s126
      %s141 = sphi 0, %s127
      %s145 = sphi 0, %s145
      %s147 = sphi 0, %s145
      %s148 = sphi 0, %s147
      %s162 = sphi 0, %s148
      %s166 = sphi 0, %s166
      %s168 = sphi 0, %s166
      %s169 = sphi 0, %s168
      %s183 = sphi 0, %s169
      %s187 = sphi 0, %s187
      %s189 = sphi 0, %s187
      %s190 = sphi 0, %s189
      %s204 = sphi 0, %s190
    $region4: #{tpu_custom_call.1} parent=1 // loop_header_branch
      %25 = sbr.rel (%p23) target = $region8
    $region5: #{tpu_custom_call.1} parent=1 // loop_body
      %s27 = ssub.s32 %s22, 1
      %s28 = ssub.s32 %s22, 2
      %s29 = sadd.s32 %s22, 1
      %s30 = ssub.s32 %s22, %s29
      %p31 = scmp.eq.s32.totalorder %s30, 0
      %s33 = sadd.s32 %s32, 1
      %s34 = scalar_select %p31, %s32, %s33
      %p37 = pneg %p31
      %p38 = scmp.eq.s32.totalorder %s22, 2
      %p39 = por %p37, %p38
      %p40 = scmp.ne.s32.totalorder %s32, %s35
      %p41 = scmp.eq.s32.totalorder %s22, 0
      %p42 = por %p40, %p41
      %p43 = scmp.ne.s32.totalorder %s32, %s35
      %p44 = scmp.eq.s32.totalorder %s27, 2
      %p45 = por %p43, %p44
      %p46 = scmp.ne.s32.totalorder %s35, %s36
      %p47 = scmp.eq.s32.totalorder %s27, 0
      %p48 = por %p46, %p47
      %p49 = scmp.ne.s32.totalorder %s35, %s36
      %p50 = scmp.eq.s32.totalorder %s28, 2
      %p51 = por %p49, %p50
      %p53 = scmp.ne.s32.totalorder %s36, %s52
      %p54 = scmp.eq.s32.totalorder %s28, 0
      %p55 = por %p53, %p54
      %s56 = ssub.s32 %s22, %s29
      %p57 = scmp.eq.s32.totalorder %s56, 0
      %s59 = sadd.s32 %s58, 1
      %s60 = scalar_select %p57, %s58, %s59
      %p63 = pneg %p57
      %p64 = scmp.eq.s32.totalorder %s22, 2
      %p65 = por %p63, %p64
      %p66 = scmp.ne.s32.totalorder %s58, %s61
      %p67 = scmp.eq.s32.totalorder %s22, 0
      %p68 = por %p66, %p67
      %p69 = scmp.ne.s32.totalorder %s58, %s61
      %p70 = scmp.eq.s32.totalorder %s27, 2
      %p71 = por %p69, %p70
      %p72 = scmp.ne.s32.totalorder %s61, %s62
      %p73 = scmp.eq.s32.totalorder %s27, 0
      %p74 = por %p72, %p73
      %p75 = scmp.ne.s32.totalorder %s61, %s62
      %p76 = scmp.eq.s32.totalorder %s28, 2
      %p77 = por %p75, %p76
      %p79 = scmp.ne.s32.totalorder %s62, %s78
      %p80 = scmp.eq.s32.totalorder %s28, 0
      %p81 = por %p79, %p80
      %s83 = sadd.s32 %s82, 1
      %p86 = scmp.eq.s32.totalorder %s22, 2
      %p87 = scmp.ne.s32.totalorder %s82, %s84
      %p88 = scmp.eq.s32.totalorder %s22, 0
      %p89 = por %p87, %p88
      %p90 = scmp.ne.s32.totalorder %s82, %s84
      %p91 = scmp.eq.s32.totalorder %s27, 2
      %p92 = por %p90, %p91
      %p93 = scmp.ne.s32.totalorder %s84, %s85
      %p94 = scmp.eq.s32.totalorder %s27, 0
      %p95 = por %p93, %p94
      %p96 = scmp.ne.s32.totalorder %s84, %s85
      %p97 = scmp.eq.s32.totalorder %s28, 2
      %p98 = por %p96, %p97
      %p100 = scmp.ne.s32.totalorder %s85, %s99
      %p101 = scmp.eq.s32.totalorder %s28, 0
      %p102 = por %p100, %p101
      %s104 = sadd.s32 %s103, 1
      %p107 = scmp.eq.s32.totalorder %s22, 2
      %p108 = scmp.ne.s32.totalorder %s103, %s105
      %p109 = scmp.eq.s32.totalorder %s22, 0
      %p110 = por %p108, %p109
      %p111 = scmp.ne.s32.totalorder %s103, %s105
      %p112 = scmp.eq.s32.totalorder %s27, 2
      %p113 = por %p111, %p112
      %p114 = scmp.ne.s32.totalorder %s105, %s106
      %p115 = scmp.eq.s32.totalorder %s27, 0
      %p116 = por %p114, %p115
      %p117 = scmp.ne.s32.totalorder %s105, %s106
      %p118 = scmp.eq.s32.totalorder %s28, 2
      %p119 = por %p117, %p118
      %p121 = scmp.ne.s32.totalorder %s106, %s120
      %p122 = scmp.eq.s32.totalorder %s28, 0
      %p123 = por %p121, %p122
      %s125 = sadd.s32 %s124, 1
      %p128 = scmp.eq.s32.totalorder %s22, 2
      %p129 = scmp.ne.s32.totalorder %s124, %s126
      %p130 = scmp.eq.s32.totalorder %s22, 0
      %p131 = por %p129, %p130
      %p132 = scmp.ne.s32.totalorder %s124, %s126
      %p133 = scmp.eq.s32.totalorder %s27, 2
      %p134 = por %p132, %p133
      %p135 = scmp.ne.s32.totalorder %s126, %s127
      %p136 = scmp.eq.s32.totalorder %s27, 0
      %p137 = por %p135, %p136
      %p138 = scmp.ne.s32.totalorder %s126, %s127
      %p139 = scmp.eq.s32.totalorder %s28, 2
      %p140 = por %p138, %p139
      %p142 = scmp.ne.s32.totalorder %s127, %s141
      %p143 = scmp.eq.s32.totalorder %s28, 0
      %p144 = por %p142, %p143
      %s146 = sadd.s32 %s145, 1
      %p149 = scmp.eq.s32.totalorder %s22, 2
      %p150 = scmp.ne.s32.totalorder %s145, %s147
      %p151 = scmp.eq.s32.totalorder %s22, 0
      %p152 = por %p150, %p151
      %p153 = scmp.ne.s32.totalorder %s145, %s147
      %p154 = scmp.eq.s32.totalorder %s27, 2
      %p155 = por %p153, %p154
      %p156 = scmp.ne.s32.totalorder %s147, %s148
      %p157 = scmp.eq.s32.totalorder %s27, 0
      %p158 = por %p156, %p157
      %p159 = scmp.ne.s32.totalorder %s147, %s148
      %p160 = scmp.eq.s32.totalorder %s28, 2
      %p161 = por %p159, %p160
      %p163 = scmp.ne.s32.totalorder %s148, %s162
      %p164 = scmp.eq.s32.totalorder %s28, 0
      %p165 = por %p163, %p164
      %s167 = sadd.s32 %s166, 1
      %p170 = scmp.eq.s32.totalorder %s22, 2
      %p171 = scmp.ne.s32.totalorder %s166, %s168
      %p172 = scmp.eq.s32.totalorder %s22, 0
      %p173 = por %p171, %p172
      %p174 = scmp.ne.s32.totalorder %s166, %s168
      %p175 = scmp.eq.s32.totalorder %s27, 2
      %p176 = por %p174, %p175
      %p177 = scmp.ne.s32.totalorder %s168, %s169
      %p178 = scmp.eq.s32.totalorder %s27, 0
      %p179 = por %p177, %p178
      %p180 = scmp.ne.s32.totalorder %s168, %s169
      %p181 = scmp.eq.s32.totalorder %s28, 2
      %p182 = por %p180, %p181
      %p184 = scmp.ne.s32.totalorder %s169, %s183
      %p185 = scmp.eq.s32.totalorder %s28, 0
      %p186 = por %p184, %p185
      %s188 = sadd.s32 %s187, 1
      %p191 = scmp.eq.s32.totalorder %s22, 2
      %p192 = scmp.ne.s32.totalorder %s187, %s189
      %p193 = scmp.eq.s32.totalorder %s22, 0
      %p194 = por %p192, %p193
      %p195 = scmp.ne.s32.totalorder %s187, %s189
      %p196 = scmp.eq.s32.totalorder %s27, 2
      %p197 = por %p195, %p196
      %p198 = scmp.ne.s32.totalorder %s189, %s190
      %p199 = scmp.eq.s32.totalorder %s27, 0
      %p200 = por %p198, %p199
      %p201 = scmp.ne.s32.totalorder %s189, %s190
      %p202 = scmp.eq.s32.totalorder %s28, 2
      %p203 = por %p201, %p202
      %p205 = scmp.ne.s32.totalorder %s190, %s204
      %p206 = scmp.eq.s32.totalorder %s28, 0
      %p207 = por %p205, %p206
      %p208 = scmp.le.s32.totalorder 1, %s22
      %p209 = scmp.lt.s32.totalorder %s22, 4
      %p210 = pnand %p208, %p209
      %p211 = pneg %p210
      // Predicated region
      $region9: #{tpu_custom_call.1} parent=5 // pred_check
        _
      $region10: #{tpu_custom_call.1} parent=5 // pred_check_branch
        %213 = sbr.rel (%p210) target = $region12
      $region11: #{tpu_custom_call.1} parent=5 // pred_region
        %s214 = ssub.s32 %s22, 1
        // Predicated region
        $region13: #{tpu_custom_call.1} parent=11 // pred_check
          %p215 = pneg %p95
        $region14: #{tpu_custom_call.1} parent=11 // pred_check_branch
          %217 = sbr.rel (%p215) target = $region16
        $region15: #{tpu_custom_call.1} parent=11 // pred_region
          %s219 = ssub.s32 2048, 2048
          %220 = vsyncadd [#allocation7], %s219
          %s221 = sshll.u32 [#allocation8], 4
          %s222 = int_to_ptr.vmem [resolvable:$true] %s221
          %227 = dma.hbm_to_vmem [thread:$0]  %s2, 2048, %s222, [#allocation7], 128, 128, 8
        $region16: #{tpu_custom_call.1} parent=11 // pred_fallthru
          _
        // Predicated region
        $region17: #{tpu_custom_call.1} parent=11 // pred_check
          %p228 = pneg %p116
        $region18: #{tpu_custom_call.1} parent=11 // pred_check_branch
          %230 = sbr.rel (%p228) target = $region20
        $region19: #{tpu_custom_call.1} parent=11 // pred_region
          %s232 = ssub.s32 2048, 2048
          %233 = vsyncadd [#allocation10], %s232
          %s234 = sshll.u32 [#allocation9], 4
          %s235 = int_to_ptr.vmem [resolvable:$true] %s234
          %240 = dma.hbm_to_vmem [thread:$0]  %s3, 2048, %s235, [#allocation10], 128, 128, 8
        $region20: #{tpu_custom_call.1} parent=11 // pred_fallthru
          _
        // Predicated region
        $region21: #{tpu_custom_call.1} parent=11 // pred_check
          %p241 = pneg %p137
        $region22: #{tpu_custom_call.1} parent=11 // pred_check_branch
          %243 = sbr.rel (%p241) target = $region24
        $region23: #{tpu_custom_call.1} parent=11 // pred_region
          %s245 = ssub.s32 2048, 2048
          %246 = vsyncadd [#allocation10], %s245
          %s247 = sshll.u32 [#allocation11], 4
          %s248 = int_to_ptr.vmem [resolvable:$true] %s247
          %253 = dma.hbm_to_vmem [thread:$0]  %s4, 2048, %s248, [#allocation10], 128, 128, 8
        $region24: #{tpu_custom_call.1} parent=11 // pred_fallthru
          _
        // Predicated region
        $region25: #{tpu_custom_call.1} parent=11 // pred_check
          %p254 = pneg %p158
        $region26: #{tpu_custom_call.1} parent=11 // pred_check_branch
          %256 = sbr.rel (%p254) target = $region28
        $region27: #{tpu_custom_call.1} parent=11 // pred_region
          %s258 = ssub.s32 16, 16
          %259 = vsyncadd [#allocation13], %s258
          %s261 = sshll.u32 [#allocation12], 4
          %s262 = int_to_ptr.vmem [resolvable:$true] %s261
          %264 = dma.hbm_to_vmem [thread:$0]  %s5, 16, %s262, [#allocation13]
        $region28: #{tpu_custom_call.1} parent=11 // pred_fallthru
          _
        // Predicated region
        $region29: #{tpu_custom_call.1} parent=11 // pred_check
          %p265 = pneg %p179
        $region30: #{tpu_custom_call.1} parent=11 // pred_check_branch
          %267 = sbr.rel (%p265) target = $region32
        $region31: #{tpu_custom_call.1} parent=11 // pred_region
          %s269 = ssub.s32 16, 16
          %270 = vsyncadd [#allocation13], %s269
          %s272 = sshll.u32 [#allocation14], 4
          %s273 = int_to_ptr.vmem [resolvable:$true] %s272
          %275 = dma.hbm_to_vmem [thread:$0]  %s6, 16, %s273, [#allocation13]
        $region32: #{tpu_custom_call.1} parent=11 // pred_fallthru
          _
      $region12: #{tpu_custom_call.1} parent=5 // pred_fallthru
        _
      %p276 = scmp.lt.s32.totalorder %s22, 3
      // Predicated region
      $region33: #{tpu_custom_call.1} parent=5 // pred_check
        %p277 = pneg %p276
      $region34: #{tpu_custom_call.1} parent=5 // pred_check_branch
        %279 = sbr.rel (%p277) target = $region36
      $region35: #{tpu_custom_call.1} parent=5 // pred_region
        // Predicated region
        $region37: #{tpu_custom_call.1} parent=35 // pred_check
          %p280 = pneg %p42
        $region38: #{tpu_custom_call.1} parent=35 // pred_check_branch
          %282 = sbr.rel (%p280) target = $region40
        $region39: #{tpu_custom_call.1} parent=35 // pred_region
          %s283 = sand.u32 %s32, 1
          %s284 = scalar_lea.sflag [#allocation4], %s283
          %s285 = sand.u32 %s32, 1
          %s286 = smul.addr %s285, 16
          %s287 = scalar_lea.vmem [#allocation3], %s286
          %s288 = smul.u32 8, %s22
          %s290 = ssub.s32 256, 256
          %291 = vsyncadd %s284, %s290
          %s292 = smul.addr %s288, 32
          %s293 = scalar_lea.hbm %s0, %s292
          %s295 = sshll.u32 %s287, 4
          %s296 = int_to_ptr.vmem [resolvable:$true] %s295
          %298 = dma.hbm_to_vmem [thread:$0]  %s293, 256, %s296, %s284
        $region40: #{tpu_custom_call.1} parent=35 // pred_fallthru
          _
        // Predicated region
        $region41: #{tpu_custom_call.1} parent=35 // pred_check
          %p299 = pneg %p68
        $region42: #{tpu_custom_call.1} parent=35 // pred_check_branch
          %301 = sbr.rel (%p299) target = $region44
        $region43: #{tpu_custom_call.1} parent=35 // pred_region
          %s302 = sand.u32 %s22, 1
          %s303 = scalar_lea.sflag [#allocation7], %s302
          %s304 = sand.u32 %s58, 1
          %s305 = smul.addr %s304, 1024
          %s306 = scalar_lea.vmem [#allocation6], %s305
          %s307 = smul.u32 128, %s22
          %s309 = ssub.s32 16384, 16384
          %310 = vsyncadd %s303, %s309
          %s311 = smul.addr %s307, 128
          %s312 = scalar_lea.hbm %s1, %s311
          %s313 = sshll.u32 %s306, 4
          %s314 = int_to_ptr.vmem [resolvable:$true] %s313
          %319 = dma.hbm_to_vmem [thread:$0]  %s312, 16384, %s314, %s303, 128, 128, 8
        $region44: #{tpu_custom_call.1} parent=35 // pred_fallthru
          _
      $region36: #{tpu_custom_call.1} parent=5 // pred_fallthru
        _
      %p320 = scmp.le.s32.totalorder 1, %s22
      %p321 = scmp.lt.s32.totalorder %s22, 4
      %p322 = pnand %p320, %p321
      %p323 = pneg %p322
      // Predicated region
      $region45: #{tpu_custom_call.1} parent=5 // pred_check
        _
      $region46: #{tpu_custom_call.1} parent=5 // pred_check_branch
        %325 = sbr.rel (%p322) target = $region48
      $region47: #{tpu_custom_call.1} parent=5 // pred_region
        %s326 = ssub.s32 %s22, 1
        %s327 = sand.u32 %s35, 1
        %s328 = scalar_lea.sflag [#allocation4], %s327
        %s329 = sand.u32 %s35, 1
        %s330 = smul.addr %s329, 16
        %s331 = scalar_lea.vmem [#allocation3], %s330
        // Predicated region
        $region49: #{tpu_custom_call.1} parent=47 // pred_check
          %p332 = pneg %p48
        $region50: #{tpu_custom_call.1} parent=47 // pred_check_branch
          %334 = sbr.rel (%p332) target = $region52
        $region51: #{tpu_custom_call.1} parent=47 // pred_region
          %335 = dma.done %s328, 256
        $region52: #{tpu_custom_call.1} parent=47 // pred_fallthru
          _
        %s336 = sand.u32 %s27, 1
        %s337 = scalar_lea.sflag [#allocation7], %s336
        %s338 = sand.u32 %s61, 1
        %s339 = smul.addr %s338, 1024
        %s340 = scalar_lea.vmem [#allocation6], %s339
        // Predicated region
        $region53: #{tpu_custom_call.1} parent=47 // pred_check
          %p341 = pneg %p74
        $region54: #{tpu_custom_call.1} parent=47 // pred_check_branch
          %343 = sbr.rel (%p341) target = $region56
        $region55: #{tpu_custom_call.1} parent=47 // pred_region
          %344 = dma.done %s337, 16384
        $region56: #{tpu_custom_call.1} parent=47 // pred_fallthru
          _
        // Predicated region
        $region57: #{tpu_custom_call.1} parent=47 // pred_check
          %p345 = pneg %p95
        $region58: #{tpu_custom_call.1} parent=47 // pred_check_branch
          %347 = sbr.rel (%p345) target = $region60
        $region59: #{tpu_custom_call.1} parent=47 // pred_region
          %348 = dma.done [#allocation7], 2048
        $region60: #{tpu_custom_call.1} parent=47 // pred_fallthru
          _
        // Predicated region
        $region61: #{tpu_custom_call.1} parent=47 // pred_check
          %p349 = pneg %p116
        $region62: #{tpu_custom_call.1} parent=47 // pred_check_branch
          %351 = sbr.rel (%p349) target = $region64
        $region63: #{tpu_custom_call.1} parent=47 // pred_region
          %352 = dma.done [#allocation10], 2048
        $region64: #{tpu_custom_call.1} parent=47 // pred_fallthru
          _
        // Predicated region
        $region65: #{tpu_custom_call.1} parent=47 // pred_check
          %p353 = pneg %p137
        $region66: #{tpu_custom_call.1} parent=47 // pred_check_branch
          %355 = sbr.rel (%p353) target = $region68
        $region67: #{tpu_custom_call.1} parent=47 // pred_region
          %356 = dma.done [#allocation10], 2048
        $region68: #{tpu_custom_call.1} parent=47 // pred_fallthru
          _
        // Predicated region
        $region69: #{tpu_custom_call.1} parent=47 // pred_check
          %p357 = pneg %p158
        $region70: #{tpu_custom_call.1} parent=47 // pred_check_branch
          %359 = sbr.rel (%p357) target = $region72
        $region71: #{tpu_custom_call.1} parent=47 // pred_region
          %360 = dma.done [#allocation13], 16
        $region72: #{tpu_custom_call.1} parent=47 // pred_fallthru
          _
        // Predicated region
        $region73: #{tpu_custom_call.1} parent=47 // pred_check
          %p361 = pneg %p179
        $region74: #{tpu_custom_call.1} parent=47 // pred_check_branch
          %363 = sbr.rel (%p361) target = $region76
        $region75: #{tpu_custom_call.1} parent=47 // pred_region
          %364 = dma.done [#allocation13], 16
        $region76: #{tpu_custom_call.1} parent=47 // pred_fallthru
          _
        %s365 = sand.u32 %s35, 1
        %s366 = scalar_lea.sflag [#allocation4], %s365
        %s367 = sand.u32 %s35, 1
        %s368 = smul.addr %s367, 16
        %s369 = scalar_lea.vmem [#allocation3], %s368
        %p370 = pneg %p48
        %p371 = pneg %p45
        %s372 = sand.u32 %s27, 1
        %s373 = scalar_lea.sflag [#allocation7], %s372
        %s374 = sand.u32 %s61, 1
        %s375 = smul.addr %s374, 1024
        %s376 = scalar_lea.vmem [#allocation6], %s375
        %p377 = pneg %p74
        %p378 = pneg %p71
        %p379 = pneg %p95
        %p380 = pneg %p92
        %p381 = pneg %p116
        %p382 = pneg %p113
        %p383 = pneg %p137
        %p384 = pneg %p134
        %p385 = pneg %p158
        %p386 = pneg %p155
        %p387 = pneg %p179
        %p388 = pneg %p176
        %p389 = pneg %p200
        %p390 = pneg %p197
        %s391 = smul.u32 8, %s27
        %s392 = smul.u32 128, %s27
        %p394 = scmp.eq.s32.totalorder %s27, 0
        // Predicated region
        $region77: #{tpu_custom_call.1} parent=47 // pred_check
          %p395 = pneg %p394
        $region78: #{tpu_custom_call.1} parent=47 // pred_check_branch
          %397 = sbr.rel (%p395) target = $region80
        $region79: #{tpu_custom_call.1} parent=47 // pred_region
          %398 = vst [vmem:[#allocation2] sm:$0x3] 0.0
        $region80: #{tpu_custom_call.1} parent=47 // pred_fallthru
          _
        %v399 = vld [vmem:[#allocation2] sm:$0x3]
        %v400 = vld [vmem:[%s331] sm:$0xff]
        %v401 = vld [vmem:[%s331 + $0x8] sm:$0xff]
        %v404 = vcombine.high %v400, %v400
        %v406 = vunpack.c.l.s4 1983009808
        %v407 = vunpack.c.0.s8 %v406
        %v408 = vlaneseq
        %v409 = vshrl.u32 %v408, 7
        %v410 = vsub.s32 %v407, %v409
        %v411 = vrot.slane %v400, %v410
        %v413 = vunpack.c.l.s4 1983009808
        %v414 = vunpack.c.0.s8 %v413
        %v415 = vlaneseq
        %v416 = vshrl.u32 %v415, 7
        %v417 = vsub.s32 %v414, %v416
        %v418 = vrot.slane %v404, %v417
        %v419 = vcombine.high %v411, %v411
        %v420 = vcombine.high %v418, %v418
        %v421 = vcombine.high %v401, %v401
        %v423 = vunpack.c.l.s4 1983009808
        %v424 = vunpack.c.0.s8 %v423
        %v425 = vlaneseq
        %v426 = vshrl.u32 %v425, 7
        %v427 = vsub.s32 %v424, %v426
        %v428 = vrot.slane %v401, %v427
        %v430 = vunpack.c.l.s4 1983009808
        %v431 = vunpack.c.0.s8 %v430
        %v432 = vlaneseq
        %v433 = vshrl.u32 %v432, 7
        %v434 = vsub.s32 %v431, %v433
        %v435 = vrot.slane %v421, %v434
        %v436 = vcombine.high %v428, %v428
        %v437 = vcombine.high %v435, %v435
        %v446 = vpack.c.bf16 %v411, %v411
        %v447 = vpack.c.bf16 %v419, %v419
        %v448 = vpack.c.bf16 %v418, %v418
        %v449 = vpack.c.bf16 %v420, %v420
        %v450 = vpack.c.bf16 %v428, %v428
        %v451 = vpack.c.bf16 %v436, %v436
        %v452 = vpack.c.bf16 %v435, %v435
        %v453 = vpack.c.bf16 %v437, %v437
        %v454 = vld [vmem:[%s340] sm:$0xff]
        %v455 = vld [vmem:[%s340 + $0x8] sm:$0xff]
        %v456 = vld [vmem:[%s340 + $0x10] sm:$0xff]
        %v457 = vld [vmem:[%s340 + $0x18] sm:$0xff]
        %v458 = vld [vmem:[%s340 + $0x20] sm:$0xff]
        %v459 = vld [vmem:[%s340 + $0x28] sm:$0xff]
        %v460 = vld [vmem:[%s340 + $0x30] sm:$0xff]
        %v461 = vld [vmem:[%s340 + $0x38] sm:$0xff]
        %v462 = vld [vmem:[%s340 + $0x40] sm:$0xff]
        %v463 = vld [vmem:[%s340 + $0x48] sm:$0xff]
        %v464 = vld [vmem:[%s340 + $0x50] sm:$0xff]
        %v465 = vld [vmem:[%s340 + $0x58] sm:$0xff]
        %v466 = vld [vmem:[%s340 + $0x60] sm:$0xff]
        %v467 = vld [vmem:[%s340 + $0x68] sm:$0xff]
        %v468 = vld [vmem:[%s340 + $0x70] sm:$0xff]
        %v469 = vld [vmem:[%s340 + $0x78] sm:$0xff]
        %v470 = vld [vmem:[%s340 + $0x80] sm:$0xff]
        %v471 = vld [vmem:[%s340 + $0x88] sm:$0xff]
        %v472 = vld [vmem:[%s340 + $0x90] sm:$0xff]
        %v473 = vld [vmem:[%s340 + $0x98] sm:$0xff]
        %v474 = vld [vmem:[%s340 + $0xa0] sm:$0xff]
        %v475 = vld [vmem:[%s340 + $0xa8] sm:$0xff]
        %v476 = vld [vmem:[%s340 + $0xb0] sm:$0xff]
        %v477 = vld [vmem:[%s340 + $0xb8] sm:$0xff]
        %v478 = vld [vmem:[%s340 + $0xc0] sm:$0xff]
        %v479 = vld [vmem:[%s340 + $0xc8] sm:$0xff]
        %v480 = vld [vmem:[%s340 + $0xd0] sm:$0xff]
        %v481 = vld [vmem:[%s340 + $0xd8] sm:$0xff]
        %v482 = vld [vmem:[%s340 + $0xe0] sm:$0xff]
        %v483 = vld [vmem:[%s340 + $0xe8] sm:$0xff]
        %v484 = vld [vmem:[%s340 + $0xf0] sm:$0xff]
        %v485 = vld [vmem:[%s340 + $0xf8] sm:$0xff]
        %v486 = vld [vmem:[%s340 + $0x100] sm:$0xff]
        %v487 = vld [vmem:[%s340 + $0x108] sm:$0xff]
        %v488 = vld [vmem:[%s340 + $0x110] sm:$0xff]
        %v489 = vld [vmem:[%s340 + $0x118] sm:$0xff]
        %v490 = vld [vmem:[%s340 + $0x120] sm:$0xff]
        %v491 = vld [vmem:[%s340 + $0x128] sm:$0xff]
        %v492 = vld [vmem:[%s340 + $0x130] sm:$0xff]
        %v493 = vld [vmem:[%s340 + $0x138] sm:$0xff]
        %v494 = vld [vmem:[%s340 + $0x140] sm:$0xff]
        %v495 = vld [vmem:[%s340 + $0x148] sm:$0xff]
        %v496 = vld [vmem:[%s340 + $0x150] sm:$0xff]
        %v497 = vld [vmem:[%s340 + $0x158] sm:$0xff]
        %v498 = vld [vmem:[%s340 + $0x160] sm:$0xff]
        %v499 = vld [vmem:[%s340 + $0x168] sm:$0xff]
        %v500 = vld [vmem:[%s340 + $0x170] sm:$0xff]
        %v501 = vld [vmem:[%s340 + $0x178] sm:$0xff]
        %v502 = vld [vmem:[%s340 + $0x180] sm:$0xff]
        %v503 = vld [vmem:[%s340 + $0x188] sm:$0xff]
        %v504 = vld [vmem:[%s340 + $0x190] sm:$0xff]
        %v505 = vld [vmem:[%s340 + $0x198] sm:$0xff]
        %v506 = vld [vmem:[%s340 + $0x1a0] sm:$0xff]
        %v507 = vld [vmem:[%s340 + $0x1a8] sm:$0xff]
        %v508 = vld [vmem:[%s340 + $0x1b0] sm:$0xff]
        %v509 = vld [vmem:[%s340 + $0x1b8] sm:$0xff]
        %v510 = vld [vmem:[%s340 + $0x1c0] sm:$0xff]
        %v511 = vld [vmem:[%s340 + $0x1c8] sm:$0xff]
        %v512 = vld [vmem:[%s340 + $0x1d0] sm:$0xff]
        %v513 = vld [vmem:[%s340 + $0x1d8] sm:$0xff]
        %v514 = vld [vmem:[%s340 + $0x1e0] sm:$0xff]
        %v515 = vld [vmem:[%s340 + $0x1e8] sm:$0xff]
        %v516 = vld [vmem:[%s340 + $0x1f0] sm:$0xff]
        %v517 = vld [vmem:[%s340 + $0x1f8] sm:$0xff]
        %v518 = vld [vmem:[%s340 + $0x200] sm:$0xff]
        %v519 = vld [vmem:[%s340 + $0x208] sm:$0xff]
        %v520 = vld [vmem:[%s340 + $0x210] sm:$0xff]
        %v521 = vld [vmem:[%s340 + $0x218] sm:$0xff]
        %v522 = vld [vmem:[%s340 + $0x220] sm:$0xff]
        %v523 = vld [vmem:[%s340 + $0x228] sm:$0xff]
        %v524 = vld [vmem:[%s340 + $0x230] sm:$0xff]
        %v525 = vld [vmem:[%s340 + $0x238] sm:$0xff]
        %v526 = vld [vmem:[%s340 + $0x240] sm:$0xff]
        %v527 = vld [vmem:[%s340 + $0x248] sm:$0xff]
        %v528 = vld [vmem:[%s340 + $0x250] sm:$0xff]
        %v529 = vld [vmem:[%s340 + $0x258] sm:$0xff]
        %v530 = vld [vmem:[%s340 + $0x260] sm:$0xff]
        %v531 = vld [vmem:[%s340 + $0x268] sm:$0xff]
        %v532 = vld [vmem:[%s340 + $0x270] sm:$0xff]
        %v533 = vld [vmem:[%s340 + $0x278] sm:$0xff]
        %v534 = vld [vmem:[%s340 + $0x280] sm:$0xff]
        %v535 = vld [vmem:[%s340 + $0x288] sm:$0xff]
        %v536 = vld [vmem:[%s340 + $0x290] sm:$0xff]
        %v537 = vld [vmem:[%s340 + $0x298] sm:$0xff]
        %v538 = vld [vmem:[%s340 + $0x2a0] sm:$0xff]
        %v539 = vld [vmem:[%s340 + $0x2a8] sm:$0xff]
        %v540 = vld [vmem:[%s340 + $0x2b0] sm:$0xff]
        %v541 = vld [vmem:[%s340 + $0x2b8] sm:$0xff]
        %v542 = vld [vmem:[%s340 + $0x2c0] sm:$0xff]
        %v543 = vld [vmem:[%s340 + $0x2c8] sm:$0xff]
        %v544 = vld [vmem:[%s340 + $0x2d0] sm:$0xff]
        %v545 = vld [vmem:[%s340 + $0x2d8] sm:$0xff]
        %v546 = vld [vmem:[%s340 + $0x2e0] sm:$0xff]
        %v547 = vld [vmem:[%s340 + $0x2e8] sm:$0xff]
        %v548 = vld [vmem:[%s340 + $0x2f0] sm:$0xff]
        %v549 = vld [vmem:[%s340 + $0x2f8] sm:$0xff]
        %v550 = vld [vmem:[%s340 + $0x300] sm:$0xff]
        %v551 = vld [vmem:[%s340 + $0x308] sm:$0xff]
        %v552 = vld [vmem:[%s340 + $0x310] sm:$0xff]
        %v553 = vld [vmem:[%s340 + $0x318] sm:$0xff]
        %v554 = vld [vmem:[%s340 + $0x320] sm:$0xff]
        %v555 = vld [vmem:[%s340 + $0x328] sm:$0xff]
        %v556 = vld [vmem:[%s340 + $0x330] sm:$0xff]
        %v557 = vld [vmem:[%s340 + $0x338] sm:$0xff]
        %v558 = vld [vmem:[%s340 + $0x340] sm:$0xff]
        %v559 = vld [vmem:[%s340 + $0x348] sm:$0xff]
        %v560 = vld [vmem:[%s340 + $0x350] sm:$0xff]
        %v561 = vld [vmem:[%s340 + $0x358] sm:$0xff]
        %v562 = vld [vmem:[%s340 + $0x360] sm:$0xff]
        %v563 = vld [vmem:[%s340 + $0x368] sm:$0xff]
        %v564 = vld [vmem:[%s340 + $0x370] sm:$0xff]
        %v565 = vld [vmem:[%s340 + $0x378] sm:$0xff]
        %v566 = vld [vmem:[%s340 + $0x380] sm:$0xff]
        %v567 = vld [vmem:[%s340 + $0x388] sm:$0xff]
        %v568 = vld [vmem:[%s340 + $0x390] sm:$0xff]
        %v569 = vld [vmem:[%s340 + $0x398] sm:$0xff]
        %v570 = vld [vmem:[%s340 + $0x3a0] sm:$0xff]
        %v571 = vld [vmem:[%s340 + $0x3a8] sm:$0xff]
        %v572 = vld [vmem:[%s340 + $0x3b0] sm:$0xff]
        %v573 = vld [vmem:[%s340 + $0x3b8] sm:$0xff]
        %v574 = vld [vmem:[%s340 + $0x3c0] sm:$0xff]
        %v575 = vld [vmem:[%s340 + $0x3c8] sm:$0xff]
        %v576 = vld [vmem:[%s340 + $0x3d0] sm:$0xff]
        %v577 = vld [vmem:[%s340 + $0x3d8] sm:$0xff]
        %v578 = vld [vmem:[%s340 + $0x3e0] sm:$0xff]
        %v579 = vld [vmem:[%s340 + $0x3e8] sm:$0xff]
        %v580 = vld [vmem:[%s340 + $0x3f0] sm:$0xff]
        %v581 = vld [vmem:[%s340 + $0x3f8] sm:$0xff]
        %v582 = vpack.c.bf16 %v455, %v454
        %v583 = vpack.c.bf16 %v457, %v456
        %v584 = vpack.c.bf16 %v459, %v458
        %v585 = vpack.c.bf16 %v461, %v460
        %v586 = vpack.c.bf16 %v463, %v462
        %v587 = vpack.c.bf16 %v465, %v464
        %v588 = vpack.c.bf16 %v467, %v466
        %v589 = vpack.c.bf16 %v469, %v468
        %v590 = vpack.c.bf16 %v471, %v470
        %v591 = vpack.c.bf16 %v473, %v472
        %v592 = vpack.c.bf16 %v475, %v474
        %v593 = vpack.c.bf16 %v477, %v476
        %v594 = vpack.c.bf16 %v479, %v478
        %v595 = vpack.c.bf16 %v481, %v480
        %v596 = vpack.c.bf16 %v483, %v482
        %v597 = vpack.c.bf16 %v485, %v484
        %v598 = vpack.c.bf16 %v487, %v486
        %v599 = vpack.c.bf16 %v489, %v488
        %v600 = vpack.c.bf16 %v491, %v490
        %v601 = vpack.c.bf16 %v493, %v492
        %v602 = vpack.c.bf16 %v495, %v494
        %v603 = vpack.c.bf16 %v497, %v496
        %v604 = vpack.c.bf16 %v499, %v498
        %v605 = vpack.c.bf16 %v501, %v500
        %v606 = vpack.c.bf16 %v503, %v502
        %v607 = vpack.c.bf16 %v505, %v504
        %v608 = vpack.c.bf16 %v507, %v506
        %v609 = vpack.c.bf16 %v509, %v508
        %v610 = vpack.c.bf16 %v511, %v510
        %v611 = vpack.c.bf16 %v513, %v512
        %v612 = vpack.c.bf16 %v515, %v514
        %v613 = vpack.c.bf16 %v517, %v516
        %v614 = vpack.c.bf16 %v519, %v518
        %v615 = vpack.c.bf16 %v521, %v520
        %v616 = vpack.c.bf16 %v523, %v522
        %v617 = vpack.c.bf16 %v525, %v524
        %v618 = vpack.c.bf16 %v527, %v526
        %v619 = vpack.c.bf16 %v529, %v528
        %v620 = vpack.c.bf16 %v531, %v530
        %v621 = vpack.c.bf16 %v533, %v532
        %v622 = vpack.c.bf16 %v535, %v534
        %v623 = vpack.c.bf16 %v537, %v536
        %v624 = vpack.c.bf16 %v539, %v538
        %v625 = vpack.c.bf16 %v541, %v540
        %v626 = vpack.c.bf16 %v543, %v542
        %v627 = vpack.c.bf16 %v545, %v544
        %v628 = vpack.c.bf16 %v547, %v546
        %v629 = vpack.c.bf16 %v549, %v548
        %v630 = vpack.c.bf16 %v551, %v550
        %v631 = vpack.c.bf16 %v553, %v552
        %v632 = vpack.c.bf16 %v555, %v554
        %v633 = vpack.c.bf16 %v557, %v556
        %v634 = vpack.c.bf16 %v559, %v558
        %v635 = vpack.c.bf16 %v561, %v560
        %v636 = vpack.c.bf16 %v563, %v562
        %v637 = vpack.c.bf16 %v565, %v564
        %v638 = vpack.c.bf16 %v567, %v566
        %v639 = vpack.c.bf16 %v569, %v568
        %v640 = vpack.c.bf16 %v571, %v570
        %v641 = vpack.c.bf16 %v573, %v572
        %v642 = vpack.c.bf16 %v575, %v574
        %v643 = vpack.c.bf16 %v577, %v576
        %v644 = vpack.c.bf16 %v579, %v578
        %v645 = vpack.c.bf16 %v581, %v580
        %646 = vmatprep.subr.bf16.mxu0 0
        %647 = vmatpush1.bf16.msra.mxu0 %v589
        %648 = vmatprep.subr.bf16.mxu0 0
        %649 = vmatpush1.bf16.msra.mxu0 %v588
        %650 = vmatprep.subr.bf16.mxu0 0
        %651 = vmatpush1.bf16.msra.mxu0 %v587
        %652 = vmatprep.subr.bf16.mxu0 0
        %653 = vmatpush1.bf16.msra.mxu0 %v586
        %654 = vmatprep.subr.bf16.mxu0 0
        %655 = vmatpush1.bf16.msra.mxu0 %v585
        %656 = vmatprep.subr.bf16.mxu0 0
        %657 = vmatpush1.bf16.msra.mxu0 %v584
        %658 = vmatprep.subr.bf16.mxu0 0
        %659 = vmatpush1.bf16.msra.mxu0 %v583
        %660 = vmatprep.subr.bf16.mxu0 0
        %661 = vmatpush1.bf16.msra.mxu0 %v582
        %662 = vmatprep.subr.bf16.mxu0 0
        %663 = vmatpush2.bf16.msra.mxu0 %v597
        %664 = vmatprep.subr.bf16.mxu0 0
        %665 = vmatpush2.bf16.msra.mxu0 %v596
        %666 = vmatprep.subr.bf16.mxu0 0
        %667 = vmatpush2.bf16.msra.mxu0 %v595
        %668 = vmatprep.subr.bf16.mxu0 0
        %669 = vmatpush2.bf16.msra.mxu0 %v594
        %670 = vmatprep.subr.bf16.mxu0 0
        %671 = vmatpush2.bf16.msra.mxu0 %v593
        %672 = vmatprep.subr.bf16.mxu0 0
        %673 = vmatpush2.bf16.msra.mxu0 %v592
        %674 = vmatprep.subr.bf16.mxu0 0
        %675 = vmatpush2.bf16.msra.mxu0 %v591
        %676 = vmatprep.subr.bf16.mxu0 0
        %677 = vmatpush2.bf16.msra.mxu0 %v590
        %678 = vmatprep.mubr.bf16.mxu0 %v447
        %679 = vmatmul.mubr.bf16.gmra.mxu0 %v446
        %v680 = vpop.f32.mrf.mxu0
        %v681 = vadd.f32 0.0, %v680
        %v682 = vpop.f32.mrf.mxu0
        %v683 = vpop.f32.mrf.mxu0
        %v684 = vpop.f32.mrf.mxu0
        %685 = vdwg.mxu0
        %686 = vmatprep.subr.bf16.mxu0 0
        %687 = vmatpush1.bf16.msra.mxu0 %v605
        %688 = vmatprep.subr.bf16.mxu0 0
        %689 = vmatpush1.bf16.msra.mxu0 %v604
        %690 = vmatprep.subr.bf16.mxu0 0
        %691 = vmatpush1.bf16.msra.mxu0 %v603
        %692 = vmatprep.subr.bf16.mxu0 0
        %693 = vmatpush1.bf16.msra.mxu0 %v602
        %694 = vmatprep.subr.bf16.mxu0 0
        %695 = vmatpush1.bf16.msra.mxu0 %v601
        %696 = vmatprep.subr.bf16.mxu0 0
        %697 = vmatpush1.bf16.msra.mxu0 %v600
        %698 = vmatprep.subr.bf16.mxu0 0
        %699 = vmatpush1.bf16.msra.mxu0 %v599
        %700 = vmatprep.subr.bf16.mxu0 0
        %701 = vmatpush1.bf16.msra.mxu0 %v598
        %702 = vmatprep.subr.bf16.mxu0 0
        %703 = vmatpush2.bf16.msra.mxu0 %v613
        %704 = vmatprep.subr.bf16.mxu0 0
        %705 = vmatpush2.bf16.msra.mxu0 %v612
        %706 = vmatprep.subr.bf16.mxu0 0
        %707 = vmatpush2.bf16.msra.mxu0 %v611
        %708 = vmatprep.subr.bf16.mxu0 0
        %709 = vmatpush2.bf16.msra.mxu0 %v610
        %710 = vmatprep.subr.bf16.mxu0 0
        %711 = vmatpush2.bf16.msra.mxu0 %v609
        %712 = vmatprep.subr.bf16.mxu0 0
        %713 = vmatpush2.bf16.msra.mxu0 %v608
        %714 = vmatprep.subr.bf16.mxu0 0
        %715 = vmatpush2.bf16.msra.mxu0 %v607
        %716 = vmatprep.subr.bf16.mxu0 0
        %717 = vmatpush2.bf16.msra.mxu0 %v606
        %718 = vmatprep.mubr.bf16.mxu0 %v449
        %719 = vmatmul.mubr.bf16.gmra.mxu0 %v448
        %v720 = vpop.f32.mrf.mxu0
        %v721 = vadd.f32 %v681, %v720
        %v722 = vpop.f32.mrf.mxu0
        %v723 = vpop.f32.mrf.mxu0
        %v724 = vpop.f32.mrf.mxu0
        %725 = vdwg.mxu0
        %726 = vmatprep.subr.bf16.mxu0 0
        %727 = vmatpush1.bf16.msra.mxu0 %v621
        %728 = vmatprep.subr.bf16.mxu0 0
        %729 = vmatpush1.bf16.msra.mxu0 %v620
        %730 = vmatprep.subr.bf16.mxu0 0
        %731 = vmatpush1.bf16.msra.mxu0 %v619
        %732 = vmatprep.subr.bf16.mxu0 0
        %733 = vmatpush1.bf16.msra.mxu0 %v618
        %734 = vmatprep.subr.bf16.mxu0 0
        %735 = vmatpush1.bf16.msra.mxu0 %v617
        %736 = vmatprep.subr.bf16.mxu0 0
        %737 = vmatpush1.bf16.msra.mxu0 %v616
        %738 = vmatprep.subr.bf16.mxu0 0
        %739 = vmatpush1.bf16.msra.mxu0 %v615
        %740 = vmatprep.subr.bf16.mxu0 0
        %741 = vmatpush1.bf16.msra.mxu0 %v614
        %742 = vmatprep.subr.bf16.mxu0 0
        %743 = vmatpush2.bf16.msra.mxu0 %v629
        %744 = vmatprep.subr.bf16.mxu0 0
        %745 = vmatpush2.bf16.msra.mxu0 %v628
        %746 = vmatprep.subr.bf16.mxu0 0
        %747 = vmatpush2.bf16.msra.mxu0 %v627
        %748 = vmatprep.subr.bf16.mxu0 0
        %749 = vmatpush2.bf16.msra.mxu0 %v626
        %750 = vmatprep.subr.bf16.mxu0 0
        %751 = vmatpush2.bf16.msra.mxu0 %v625
        %752 = vmatprep.subr.bf16.mxu0 0
        %753 = vmatpush2.bf16.msra.mxu0 %v624
        %754 = vmatprep.subr.bf16.mxu0 0
        %755 = vmatpush2.bf16.msra.mxu0 %v623
        %756 = vmatprep.subr.bf16.mxu0 0
        %757 = vmatpush2.bf16.msra.mxu0 %v622
        %758 = vmatprep.mubr.bf16.mxu0 %v451
        %759 = vmatmul.mubr.bf16.gmra.mxu0 %v450
        %v760 = vpop.f32.mrf.mxu0
        %v761 = vadd.f32 %v721, %v760
        %v762 = vpop.f32.mrf.mxu0
        %v763 = vpop.f32.mrf.mxu0
        %v764 = vpop.f32.mrf.mxu0
        %765 = vdwg.mxu0
        %766 = vmatprep.subr.bf16.mxu0 0
        %767 = vmatpush1.bf16.msra.mxu0 %v637
        %768 = vmatprep.subr.bf16.mxu0 0
        %769 = vmatpush1.bf16.msra.mxu0 %v636
        %770 = vmatprep.subr.bf16.mxu0 0
        %771 = vmatpush1.bf16.msra.mxu0 %v635
        %772 = vmatprep.subr.bf16.mxu0 0
        %773 = vmatpush1.bf16.msra.mxu0 %v634
        %774 = vmatprep.subr.bf16.mxu0 0
        %775 = vmatpush1.bf16.msra.mxu0 %v633
        %776 = vmatprep.subr.bf16.mxu0 0
        %777 = vmatpush1.bf16.msra.mxu0 %v632
        %778 = vmatprep.subr.bf16.mxu0 0
        %779 = vmatpush1.bf16.msra.mxu0 %v631
        %780 = vmatprep.subr.bf16.mxu0 0
        %781 = vmatpush1.bf16.msra.mxu0 %v630
        %782 = vmatprep.subr.bf16.mxu0 0
        %783 = vmatpush2.bf16.msra.mxu0 %v645
        %784 = vmatprep.subr.bf16.mxu0 0
        %785 = vmatpush2.bf16.msra.mxu0 %v644
        %786 = vmatprep.subr.bf16.mxu0 0
        %787 = vmatpush2.bf16.msra.mxu0 %v643
        %788 = vmatprep.subr.bf16.mxu0 0
        %789 = vmatpush2.bf16.msra.mxu0 %v642
        %790 = vmatprep.subr.bf16.mxu0 0
        %791 = vmatpush2.bf16.msra.mxu0 %v641
        %792 = vmatprep.subr.bf16.mxu0 0
        %793 = vmatpush2.bf16.msra.mxu0 %v640
        %794 = vmatprep.subr.bf16.mxu0 0
        %795 = vmatpush2.bf16.msra.mxu0 %v639
        %796 = vmatprep.subr.bf16.mxu0 0
        %797 = vmatpush2.bf16.msra.mxu0 %v638
        %798 = vmatprep.mubr.bf16.mxu0 %v453
        %799 = vmatmul.mubr.bf16.gmra.mxu0 %v452
        %v800 = vpop.f32.mrf.mxu0
        %v801 = vadd.f32 %v761, %v800
        %v802 = vpop.f32.mrf.mxu0
        %v803 = vpop.f32.mrf.mxu0
        %v804 = vpop.f32.mrf.mxu0
        %805 = vdwg.mxu0
        %v806 = vadd.f32 %v399, %v801
        %807 = vst [vmem:[#allocation2] sm:$0x3] %v806
        %p808 = scmp.eq.s32.totalorder %s27, 2
        // Predicated region
        $region81: #{tpu_custom_call.1} parent=47 // pred_check
          %p809 = pneg %p808
        $region82: #{tpu_custom_call.1} parent=47 // pred_check_branch
          %811 = sbr.rel (%p809) target = $region84
        $region83: #{tpu_custom_call.1} parent=47 // pred_region
          %v812 = vld [vmem:[#allocation8] sm:$0xff]
          %v813 = vld [vmem:[#allocation8 + $0x8] sm:$0xff]
          %v814 = vld [vmem:[#allocation8 + $0x10] sm:$0xff]
          %v815 = vld [vmem:[#allocation8 + $0x18] sm:$0xff]
          %v816 = vld [vmem:[#allocation8 + $0x20] sm:$0xff]
          %v817 = vld [vmem:[#allocation8 + $0x28] sm:$0xff]
          %v818 = vld [vmem:[#allocation8 + $0x30] sm:$0xff]
          %v819 = vld [vmem:[#allocation8 + $0x38] sm:$0xff]
          %v820 = vld [vmem:[#allocation8 + $0x40] sm:$0xff]
          %v821 = vld [vmem:[#allocation8 + $0x48] sm:$0xff]
          %v822 = vld [vmem:[#allocation8 + $0x50] sm:$0xff]
          %v823 = vld [vmem:[#allocation8 + $0x58] sm:$0xff]
          %v824 = vld [vmem:[#allocation8 + $0x60] sm:$0xff]
          %v825 = vld [vmem:[#allocation8 + $0x68] sm:$0xff]
          %v826 = vld [vmem:[#allocation8 + $0x70] sm:$0xff]
          %v827 = vld [vmem:[#allocation8 + $0x78] sm:$0xff]
          %v828 = vld [vmem:[#allocation9] sm:$0xff]
          %v829 = vld [vmem:[#allocation9 + $0x8] sm:$0xff]
          %v830 = vld [vmem:[#allocation9 + $0x10] sm:$0xff]
          %v831 = vld [vmem:[#allocation9 + $0x18] sm:$0xff]
          %v832 = vld [vmem:[#allocation9 + $0x20] sm:$0xff]
          %v833 = vld [vmem:[#allocation9 + $0x28] sm:$0xff]
          %v834 = vld [vmem:[#allocation9 + $0x30] sm:$0xff]
          %v835 = vld [vmem:[#allocation9 + $0x38] sm:$0xff]
          %v836 = vld [vmem:[#allocation9 + $0x40] sm:$0xff]
          %v837 = vld [vmem:[#allocation9 + $0x48] sm:$0xff]
          %v838 = vld [vmem:[#allocation9 + $0x50] sm:$0xff]
          %v839 = vld [vmem:[#allocation9 + $0x58] sm:$0xff]
          %v840 = vld [vmem:[#allocation9 + $0x60] sm:$0xff]
          %v841 = vld [vmem:[#allocation9 + $0x68] sm:$0xff]
          %v842 = vld [vmem:[#allocation9 + $0x70] sm:$0xff]
          %v843 = vld [vmem:[#allocation9 + $0x78] sm:$0xff]
          %v844 = vld [vmem:[#allocation11] sm:$0xff]
          %v845 = vld [vmem:[#allocation11 + $0x8] sm:$0xff]
          %v846 = vld [vmem:[#allocation11 + $0x10] sm:$0xff]
          %v847 = vld [vmem:[#allocation11 + $0x18] sm:$0xff]
          %v848 = vld [vmem:[#allocation11 + $0x20] sm:$0xff]
          %v849 = vld [vmem:[#allocation11 + $0x28] sm:$0xff]
          %v850 = vld [vmem:[#allocation11 + $0x30] sm:$0xff]
          %v851 = vld [vmem:[#allocation11 + $0x38] sm:$0xff]
          %v852 = vld [vmem:[#allocation11 + $0x40] sm:$0xff]
          %v853 = vld [vmem:[#allocation11 + $0x48] sm:$0xff]
          %v854 = vld [vmem:[#allocation11 + $0x50] sm:$0xff]
          %v855 = vld [vmem:[#allocation11 + $0x58] sm:$0xff]
          %v856 = vld [vmem:[#allocation11 + $0x60] sm:$0xff]
          %v857 = vld [vmem:[#allocation11 + $0x68] sm:$0xff]
          %v858 = vld [vmem:[#allocation11 + $0x70] sm:$0xff]
          %v859 = vld [vmem:[#allocation11 + $0x78] sm:$0xff]
          %v860 = vld [vmem:[#allocation12] sm:$0x1]
          %v861 = vld [vmem:[#allocation14] sm:$0x1]
          %v862 = vld [vmem:[#allocation2] sm:$0x3]
          %863 = vmatprep.subr.mxu0 0.0
          %864 = vmatpush1.msra.mxu0 %v827
          %865 = vmatprep.subr.mxu0 0.0
          %866 = vmatpush1.msra.mxu0 %v826
          %867 = vmatprep.subr.mxu0 0.0
          %868 = vmatpush1.msra.mxu0 %v825
          %869 = vmatprep.subr.mxu0 0.0
          %870 = vmatpush1.msra.mxu0 %v824
          %871 = vmatprep.subr.mxu0 0.0
          %872 = vmatpush1.msra.mxu0 %v823
          %873 = vmatprep.subr.mxu0 0.0
          %874 = vmatpush1.msra.mxu0 %v822
          %875 = vmatprep.subr.mxu0 0.0
          %876 = vmatpush1.msra.mxu0 %v821
          %877 = vmatprep.subr.mxu0 0.0
          %878 = vmatpush1.msra.mxu0 %v820
          %879 = vmatprep.subr.mxu0 0.0
          %880 = vmatpush1.msra.mxu0 %v819
          %881 = vmatprep.subr.mxu0 0.0
          %882 = vmatpush1.msra.mxu0 %v818
          %883 = vmatprep.subr.mxu0 0.0
          %884 = vmatpush1.msra.mxu0 %v817
          %885 = vmatprep.subr.mxu0 0.0
          %886 = vmatpush1.msra.mxu0 %v816
          %887 = vmatprep.subr.mxu0 0.0
          %888 = vmatpush1.msra.mxu0 %v815
          %889 = vmatprep.subr.mxu0 0.0
          %890 = vmatpush1.msra.mxu0 %v814
          %891 = vmatprep.subr.mxu0 0.0
          %892 = vmatpush1.msra.mxu0 %v813
          %893 = vmatprep.subr.mxu0 0.0
          %894 = vmatpush1.msra.mxu0 %v812
          %895 = vmatprep.subr.mxu0 0.0
          %896 = vmatpush2.msra.mxu0 0.0
          %897 = vmatprep.subr.mxu0 0.0
          %898 = vmatpush2.msra.mxu0 0.0
          %899 = vmatprep.subr.mxu0 0.0
          %900 = vmatpush2.msra.mxu0 0.0
          %901 = vmatprep.subr.mxu0 0.0
          %902 = vmatpush2.msra.mxu0 0.0
          %903 = vmatprep.subr.mxu0 0.0
          %904 = vmatpush2.msra.mxu0 0.0
          %905 = vmatprep.subr.mxu0 0.0
          %906 = vmatpush2.msra.mxu0 0.0
          %907 = vmatprep.subr.mxu0 0.0
          %908 = vmatpush2.msra.mxu0 0.0
          %909 = vmatprep.subr.mxu0 0.0
          %910 = vmatpush2.msra.mxu0 0.0
          %911 = vmatprep.subr.mxu0 0.0
          %912 = vmatpush2.msra.mxu0 0.0
          %913 = vmatprep.subr.mxu0 0.0
          %914 = vmatpush2.msra.mxu0 0.0
          %915 = vmatprep.subr.mxu0 0.0
          %916 = vmatpush2.msra.mxu0 0.0
          %917 = vmatprep.subr.mxu0 0.0
          %918 = vmatpush2.msra.mxu0 0.0
          %919 = vmatprep.subr.mxu0 0.0
          %920 = vmatpush2.msra.mxu0 0.0
          %921 = vmatprep.subr.mxu0 0.0
          %922 = vmatpush2.msra.mxu0 0.0
          %923 = vmatprep.subr.mxu0 0.0
          %924 = vmatpush2.msra.mxu0 0.0
          %925 = vmatprep.subr.mxu0 0.0
          %926 = vmatpush2.msra.mxu0 0.0
          %927 = vmatprep.mubr.f32.mxu0 0.0
          %928 = vmatmul.mubr.f32.gmra.mxu0 %v862
          %v929 = vpop.f32.mrf.mxu0
          %v930 = vadd.f32 0.5, %v929
          %v931 = vpop.f32.mrf.mxu0
          %932 = vdwg.mxu0
          %v933 = vfloor.f32 %v930
          %v934 = vadd.f32 %v933, 0.5
          %v936 = vlaneseq
          %v937 = vshrl.u32 %v936, 7
          %v938 = vsub.s32 0, %v937
          %v939 = vrot.slane %v860, %v938
          %v941 = vsub.f32 %v934, %v939
          %v943 = vlaneseq
          %v944 = vshrl.u32 %v943, 7
          %v945 = vsub.s32 0, %v944
          %v946 = vrot.slane %v861, %v945
          %v948 = vmul.f32 %v941, %v946
          %v949 = vsub.f32 0.0, %v948
          %v950 = vmul.f32 %v949, 1.442695
          %v951 = vpow.pop %v950
          %v952 = vadd.f32 %v951, 1.0
          %v953 = vrcp.pop %v952
          %v954 = vmul.f32 1.0, %v953
          %v955 = vsub.f32 %v933, 0.5
          %v956 = vsub.f32 %v955, %v939
          %v957 = vmul.f32 %v956, %v946
          %v958 = vsub.f32 0.0, %v957
          %v959 = vmul.f32 %v958, 1.442695
          %v960 = vpow.pop %v959
          %v961 = vadd.f32 %v960, 1.0
          %v962 = vrcp.pop %v961
          %v963 = vmul.f32 1.0, %v962
          %v964 = vsub.f32 %v954, %v963
          %v965 = vmax.f32 %v964, 1e-09
          %966 = vmatprep.subr.mxu0 0.0
          %967 = vmatpush1.msra.mxu0 %v843
          %968 = vmatprep.subr.mxu0 0.0
          %969 = vmatpush1.msra.mxu0 %v842
          %970 = vmatprep.subr.mxu0 0.0
          %971 = vmatpush1.msra.mxu0 %v841
          %972 = vmatprep.subr.mxu0 0.0
          %973 = vmatpush1.msra.mxu0 %v840
          %974 = vmatprep.subr.mxu0 0.0
          %975 = vmatpush1.msra.mxu0 %v839
          %976 = vmatprep.subr.mxu0 0.0
          %977 = vmatpush1.msra.mxu0 %v838
          %978 = vmatprep.subr.mxu0 0.0
          %979 = vmatpush1.msra.mxu0 %v837
          %980 = vmatprep.subr.mxu0 0.0
          %981 = vmatpush1.msra.mxu0 %v836
          %982 = vmatprep.subr.mxu0 0.0
          %983 = vmatpush1.msra.mxu0 %v835
          %984 = vmatprep.subr.mxu0 0.0
          %985 = vmatpush1.msra.mxu0 %v834
          %986 = vmatprep.subr.mxu0 0.0
          %987 = vmatpush1.msra.mxu0 %v833
          %988 = vmatprep.subr.mxu0 0.0
          %989 = vmatpush1.msra.mxu0 %v832
          %990 = vmatprep.subr.mxu0 0.0
          %991 = vmatpush1.msra.mxu0 %v831
          %992 = vmatprep.subr.mxu0 0.0
          %993 = vmatpush1.msra.mxu0 %v830
          %994 = vmatprep.subr.mxu0 0.0
          %995 = vmatpush1.msra.mxu0 %v829
          %996 = vmatprep.subr.mxu0 0.0
          %997 = vmatpush1.msra.mxu0 %v828
          %998 = vmatprep.subr.mxu0 0.0
          %999 = vmatpush2.msra.mxu0 0.0
          %1000 = vmatprep.subr.mxu0 0.0
          %1001 = vmatpush2.msra.mxu0 0.0
          %1002 = vmatprep.subr.mxu0 0.0
          %1003 = vmatpush2.msra.mxu0 0.0
          %1004 = vmatprep.subr.mxu0 0.0
          %1005 = vmatpush2.msra.mxu0 0.0
          %1006 = vmatprep.subr.mxu0 0.0
          %1007 = vmatpush2.msra.mxu0 0.0
          %1008 = vmatprep.subr.mxu0 0.0
          %1009 = vmatpush2.msra.mxu0 0.0
          %1010 = vmatprep.subr.mxu0 0.0
          %1011 = vmatpush2.msra.mxu0 0.0
          %1012 = vmatprep.subr.mxu0 0.0
          %1013 = vmatpush2.msra.mxu0 0.0
          %1014 = vmatprep.subr.mxu0 0.0
          %1015 = vmatpush2.msra.mxu0 0.0
          %1016 = vmatprep.subr.mxu0 0.0
          %1017 = vmatpush2.msra.mxu0 0.0
          %1018 = vmatprep.subr.mxu0 0.0
          %1019 = vmatpush2.msra.mxu0 0.0
          %1020 = vmatprep.subr.mxu0 0.0
          %1021 = vmatpush2.msra.mxu0 0.0
          %1022 = vmatprep.subr.mxu0 0.0
          %1023 = vmatpush2.msra.mxu0 0.0
          %1024 = vmatprep.subr.mxu0 0.0
          %1025 = vmatpush2.msra.mxu0 0.0
          %1026 = vmatprep.subr.mxu0 0.0
          %1027 = vmatpush2.msra.mxu0 0.0
          %1028 = vmatprep.subr.mxu0 0.0
          %1029 = vmatpush2.msra.mxu0 0.0
          %1030 = vmatprep.mubr.f32.mxu0 0.0
          %1031 = vmatmul.mubr.f32.gmra.mxu0 %v933
          %v1032 = vpop.f32.mrf.mxu0
          %v1033 = vadd.f32 0.0, %v1032
          %v1034 = vpop.f32.mrf.mxu0
          %1035 = vdwg.mxu0
          %1036 = vmatprep.subr.mxu0 0.0
          %1037 = vmatpush1.msra.mxu0 %v859
          %1038 = vmatprep.subr.mxu0 0.0
          %1039 = vmatpush1.msra.mxu0 %v858
          %1040 = vmatprep.subr.mxu0 0.0
          %1041 = vmatpush1.msra.mxu0 %v857
          %1042 = vmatprep.subr.mxu0 0.0
          %1043 = vmatpush1.msra.mxu0 %v856
          %1044 = vmatprep.subr.mxu0 0.0
          %1045 = vmatpush1.msra.mxu0 %v855
          %1046 = vmatprep.subr.mxu0 0.0
          %1047 = vmatpush1.msra.mxu0 %v854
          %1048 = vmatprep.subr.mxu0 0.0
          %1049 = vmatpush1.msra.mxu0 %v853
          %1050 = vmatprep.subr.mxu0 0.0
          %1051 = vmatpush1.msra.mxu0 %v852
          %1052 = vmatprep.subr.mxu0 0.0
          %1053 = vmatpush1.msra.mxu0 %v851
          %1054 = vmatprep.subr.mxu0 0.0
          %1055 = vmatpush1.msra.mxu0 %v850
          %1056 = vmatprep.subr.mxu0 0.0
          %1057 = vmatpush1.msra.mxu0 %v849
          %1058 = vmatprep.subr.mxu0 0.0
          %1059 = vmatpush1.msra.mxu0 %v848
          %1060 = vmatprep.subr.mxu0 0.0
          %1061 = vmatpush1.msra.mxu0 %v847
          %1062 = vmatprep.subr.mxu0 0.0
          %1063 = vmatpush1.msra.mxu0 %v846
          %1064 = vmatprep.subr.mxu0 0.0
          %1065 = vmatpush1.msra.mxu0 %v845
          %1066 = vmatprep.subr.mxu0 0.0
          %1067 = vmatpush1.msra.mxu0 %v844
          %1068 = vmatprep.subr.mxu0 0.0
          %1069 = vmatpush2.msra.mxu0 0.0
          %1070 = vmatprep.subr.mxu0 0.0
          %1071 = vmatpush2.msra.mxu0 0.0
          %1072 = vmatprep.subr.mxu0 0.0
          %1073 = vmatpush2.msra.mxu0 0.0
          %1074 = vmatprep.subr.mxu0 0.0
          %1075 = vmatpush2.msra.mxu0 0.0
          %1076 = vmatprep.subr.mxu0 0.0
          %1077 = vmatpush2.msra.mxu0 0.0
          %1078 = vmatprep.subr.mxu0 0.0
          %1079 = vmatpush2.msra.mxu0 0.0
          %1080 = vmatprep.subr.mxu0 0.0
          %1081 = vmatpush2.msra.mxu0 0.0
          %1082 = vmatprep.subr.mxu0 0.0
          %1083 = vmatpush2.msra.mxu0 0.0
          %1084 = vmatprep.subr.mxu0 0.0
          %1085 = vmatpush2.msra.mxu0 0.0
          %1086 = vmatprep.subr.mxu0 0.0
          %1087 = vmatpush2.msra.mxu0 0.0
          %1088 = vmatprep.subr.mxu0 0.0
          %1089 = vmatpush2.msra.mxu0 0.0
          %1090 = vmatprep.subr.mxu0 0.0
          %1091 = vmatpush2.msra.mxu0 0.0
          %1092 = vmatprep.subr.mxu0 0.0
          %1093 = vmatpush2.msra.mxu0 0.0
          %1094 = vmatprep.subr.mxu0 0.0
          %1095 = vmatpush2.msra.mxu0 0.0
          %1096 = vmatprep.subr.mxu0 0.0
          %1097 = vmatpush2.msra.mxu0 0.0
          %1098 = vmatprep.subr.mxu0 0.0
          %1099 = vmatpush2.msra.mxu0 0.0
          %1100 = vmatprep.mubr.f32.mxu0 0.0
          %1101 = vmatmul.mubr.f32.gmra.mxu0 %v933
          %v1102 = vpop.f32.mrf.mxu0
          %v1103 = vadd.f32 0.0, %v1102
          %v1104 = vpop.f32.mrf.mxu0
          %1105 = vdwg.mxu0
          %v1106 = vmul.f32 %v1103, -0.5
          %v1107 = vmul.f32 %v1106, 1.442695
          %v1108 = vpow.pop %v1107
          %v1109 = vmin.f32 %v1108, 9.090909
          %v1110 = vsub.f32 %v862, %v1033
          %v1111 = vadd.f32 %v1110, 0.5
          %v1112 = vfloor.f32 %v1111
          %v1113 = vadd.f32 %v1112, 0.5
          %v1114 = vmul.f32 %v1113, %v1109
          %v1115 = vsub.f32 0.0, %v1114
          %v1116 = vmul.f32 %v1115, 1.442695
          %v1117 = vpow.pop %v1116
          %v1118 = vadd.f32 %v1117, 1.0
          %v1119 = vrcp.pop %v1118
          %v1120 = vmul.f32 1.0, %v1119
          %v1121 = vsub.f32 %v1112, 0.5
          %v1122 = vmul.f32 %v1121, %v1109
          %v1123 = vsub.f32 0.0, %v1122
          %v1124 = vmul.f32 %v1123, 1.442695
          %v1125 = vpow.pop %v1124
          %v1126 = vadd.f32 %v1125, 1.0
          %v1127 = vrcp.pop %v1126
          %v1128 = vmul.f32 1.0, %v1127
          %v1129 = vsub.f32 %v1120, %v1128
          %v1130 = vmax.f32 %v1129, 1e-09
          %v1131 = vlog2.pop %v1130
          %v1132 = vmul.f32 %v1131, 0.6931472
          %vm1133 = vcmask 1041408
          %v1134 = vsel %vm1133, %v1132, 0.0
          %1135 = vadd.xlane.f32.xlu0 %v1134
          %v1136 = vpop.xlane.xlu0 %1135
          %v1137 = vsel %vm1133, %v1136, 0.0
          %v1138 = vrot.slane %v1137, 4
          %v1139 = vadd.f32 %v1137, %v1138
          %v1140 = vrot.slane %v1139, 2
          %v1141 = vadd.f32 %v1139, %v1140
          %v1142 = vrot.slane %v1141, 1
          %v1143 = vadd.f32 %v1141, %v1142
          %v1144 = vlog2.pop %v965
          %v1145 = vmul.f32 %v1144, 0.6931472
          %v1146 = vsel %vm1133, %v1145, 0.0
          %1147 = vadd.xlane.f32.xlu0 %v1146
          %v1148 = vpop.xlane.xlu0 %1147
          %v1149 = vsel %vm1133, %v1148, 0.0
          %v1150 = vrot.slane %v1149, 4
          %v1151 = vadd.f32 %v1149, %v1150
          %v1152 = vrot.slane %v1151, 2
          %v1153 = vadd.f32 %v1151, %v1152
          %v1154 = vrot.slane %v1153, 1
          %v1155 = vadd.f32 %v1153, %v1154
          %v1156 = vadd.f32 %v1143, %v1155
          %v1157 = vmul.f32 %v1156, -0.0007044409
          %vm1158 = vcmask 0
          %1159 = vst.msk [vmem:[#allocation15] sm:$0x1] %vm1158, %v1157
        $region84: #{tpu_custom_call.1} parent=47 // pred_fallthru
          _
        // Predicated region
        $region85: #{tpu_custom_call.1} parent=47 // pred_check
          %p1160 = pneg %p197
        $region86: #{tpu_custom_call.1} parent=47 // pred_check_branch
          %1162 = sbr.rel (%p1160) target = $region88
        $region87: #{tpu_custom_call.1} parent=47 // pred_region
          %s1164 = ssub.s32 16, 16
          %1165 = vsyncadd [#allocation5], %s1164
          %s1167 = sshll.u32 [#allocation15], 4
          %s1168 = int_to_ptr.vmem [resolvable:$true] %s1167
          %1170 = dma.vmem_to_hbm [thread:$0]  %s1168, 16, %s7, [#allocation5]
        $region88: #{tpu_custom_call.1} parent=47 // pred_fallthru
          _
        // Predicated region
        $region89: #{tpu_custom_call.1} parent=47 // pred_check
          %p1171 = pneg %p197
        $region90: #{tpu_custom_call.1} parent=47 // pred_check_branch
          %1173 = sbr.rel (%p1171) target = $region92
        $region91: #{tpu_custom_call.1} parent=47 // pred_region
          %1174 = dma.done [#allocation5], 16
        $region92: #{tpu_custom_call.1} parent=47 // pred_fallthru
          _
      $region48: #{tpu_custom_call.1} parent=5 // pred_fallthru
        _
      %p1175 = scmp.le.s32.totalorder 2, %s22
      // Predicated region
      $region93: #{tpu_custom_call.1} parent=5 // pred_check
        %p1176 = pneg %p1175
      $region94: #{tpu_custom_call.1} parent=5 // pred_check_branch
        %1178 = sbr.rel (%p1176) target = $region96
      $region95: #{tpu_custom_call.1} parent=5 // pred_region
        %s1179 = ssub.s32 %s22, 2
      $region96: #{tpu_custom_call.1} parent=5 // pred_fallthru
        _
    $region6: #{tpu_custom_call.1} parent=1 // loop_footer
      %s26 = sadd.s32 1, %s22
    $region7: #{tpu_custom_call.1} parent=1 // loop_footer_branch
      %21 = sbr.rel target = $region3
    $region8: #{tpu_custom_call.1} parent=1 // loop_exit
      _
    %1180 = vsyncpa [#allocation4], 1
    %s1181 = scalar_lea.sflag [#allocation4], 1
    %1182 = vsyncpa %s1181, 1
    %1183 = vsyncpa [#allocation7], 1
    %s1184 = scalar_lea.sflag [#allocation7], 1
    %1185 = vsyncpa %s1184, 1
    %1186 = vsyncpa [#allocation10], 1
    %1187 = vsyncpa [#allocation13], 1
    %1188 = vsyncpa [#allocation5], 1
    %s1189 = scalar_lea.sflag [#allocation5], 1
    %1190 = vsyncpa %s1189, 1

</llo_original>
